<compile_context>
chip_gen: v5e
topology: v5e:2x2
jax: 0.10.0
libtpu: 0.0.40
codegen_flags: <defaults>
</compile_context>

<pallas_src>
import numpy as np
import jax
import jax.numpy as jnp
from jax.experimental import pallas as pl
from jax.experimental.pallas import tpu as pltpu


# ----------------------------------------------------------------------------
# Fused Pallas kernel factory (closes over the static spatial geometry).
# ----------------------------------------------------------------------------
def _make_up_kernel(H, W):
    HW = H * W
    # Tap t = 3*(dy+1) + (dx+1); roll amount so that out[p] = in[(p + dy*W+dx) % HW].
    shifts = [(-((t // 3 - 1) * W + (t % 3 - 1))) % HW for t in range(9)]

    def kernel(x1_ref, x2_ref, u_ref, mask_ref, neg_ref,
               w11_ref, s11_ref,
               w21_ref, s21_ref, w22_ref, s22_ref,
               w31_ref, s31_ref, w32_ref, s32_ref, w33_ref, s33_ref,
               w41_ref, s41_ref,
               o_ref, cat_ref):
        f32 = jnp.float32

        def dot(a, b):
            return jnp.dot(a, b, preferred_element_type=f32)

        c2 = x2_ref.shape[1]
        c1 = x1_ref.shape[1]

        # Bilinear 2x upsample (align_corners=True) + F.pad fused into one
        # small matmul, then materialize the channel concat [x2 ; up] ONCE in
        # VMEM scratch: every 1x1 conv / the max pool is a single op on it.
        cat_ref[0:c2, :] = x2_ref[0].astype(f32)
        cat_ref[c2:c2 + c1, :] = dot(x1_ref[0].astype(f32), u_ref[...])
        xcat = cat_ref[...]                               # (c2+c1, HW)

        def affine_relu(acc, s_ref):                      # folded BN + bias + ReLU
            return jnp.maximum(acc + s_ref[...], 0.0)

        def conv1x1(w_ref, s_ref, inp):
            return affine_relu(dot(w_ref[...], inp), s_ref)

        def conv3x3(w_ref, s_ref, inp):
            # One MXU matmul covers all 9 taps (M = 9*Cout, K = Cin); the
            # spatial shift of each tap commutes with the channel contraction,
            # so it is applied afterwards as a lane roll (XLU) + 0/1 boundary
            # mask (VPU).  Zero "same" padding is exactly the mask.
            cout = w_ref.shape[0] // 9
            y = dot(w_ref[...], inp)                      # (9*Cout, HW)
            acc = y[4 * cout:5 * cout, :]                 # center tap: no shift/mask
            for t in range(9):
                if t == 4:
                    continue
                r = pltpu.roll(y[t * cout:(t + 1) * cout, :], shifts[t], 1)
                acc = acc + r * mask_ref[t]
            return affine_relu(acc, s_ref)

        def maxpool3(inp):
            # 3x3 stride-1 max pool via lane rolls; neg_ref[t] is 0 inside the
            # image and -1e30 in the (virtual) padding of MaxPool2d(3,1,1).
            m = inp
            for t in range(9):
                if t == 4:                                # center tap == inp
                    continue
                m = jnp.maximum(m, pltpu.roll(inp, shifts[t], 1) + neg_ref[t])
            return m

        b1 = conv1x1(w11_ref, s11_ref, xcat)
        b2 = conv3x3(w22_ref, s22_ref, conv1x1(w21_ref, s21_ref, xcat))
        b3 = conv3x3(w33_ref, s33_ref,
                     conv3x3(w32_ref, s32_ref, conv1x1(w31_ref, s31_ref, xcat)))
        b4 = conv1x1(w41_ref, s41_ref, maxpool3(xcat))

        # torch.cat order b1,b2,b3,b4 on the channel (sublane) axis.
        n1, n3, n5, pp = b1.shape[0], b2.shape[0], b3.shape[0], b4.shape[0]
        o_ref[0, 0:n1, :] = b1.astype(o_ref.dtype)
        o_ref[0, n1:n1 + n3, :] = b2.astype(o_ref.dtype)
        o_ref[0, n1 + n3:n1 + n3 + n5, :] = b3.astype(o_ref.dtype)
        o_ref[0, n1 + n3 + n5:n1 + n3 + n5 + pp, :] = b4.astype(o_ref.dtype)

    return kernel


# ----------------------------------------------------------------------------
# Host-side constant builders (numpy, trace-time constants).
# ----------------------------------------------------------------------------
def _interp_matrix(n_in, n_out):
    """(n_out, n_in): out = M @ in, bilinear, align_corners=True."""
    i = np.arange(n_out, dtype=np.float64)
    s = i * (n_in - 1) / max(n_out - 1, 1)
    i0 = np.clip(np.floor(s).astype(np.int64), 0, max(n_in - 2, 0))
    i1 = np.minimum(i0 + 1, n_in - 1)
    w1 = (s - i0).astype(np.float32)
    m = np.zeros((n_out, n_in), np.float32)
    m[np.arange(n_out), i0] += 1.0 - w1
    m[np.arange(n_out), i1] += w1
    return m


def _upsample_pad_matrix(h, w, H, W):
    """(h*w, H*W): 2x bilinear upsample + F.pad placement, as one matrix."""
    my = _interp_matrix(h, 2 * h)
    mx = _interp_matrix(w, 2 * w)
    dY, dX = H - 2 * h, W - 2 * w
    ry = np.zeros((H, h), np.float32)
    ry[dY // 2:dY // 2 + 2 * h, :] = my
    rx = np.zeros((W, w), np.float32)
    rx[dX // 2:dX // 2 + 2 * w, :] = mx
    u = np.einsum('Yy,Xx->yxYX', ry, rx).reshape(h * w, H * W)
    return jnp.asarray(u)


def _shift_masks(H, W):
    """mask (9,1,HW): 1 where tap t stays inside the image, 0 in the padding.
    neg  (9,1,HW): 0 inside, -1e30 in the padding (for the max pool)."""
    hw = H * W
    p = np.arange(hw)
    y, x = p // W, p % W
    mask = np.zeros((9, 1, hw), np.float32)
    for t in range(9):
        dy, dx = t // 3 - 1, t % 3 - 1
        ok = (y + dy >= 0) & (y + dy < H) & (x + dx >= 0) & (x + dx < W)
        mask[t, 0, ok] = 1.0
    neg = (mask - 1.0) * 1e30
    return jnp.asarray(mask), jnp.asarray(neg)


# ----------------------------------------------------------------------------
# Parameters (conv weight OIHW + bias, BN eval-mode folded into scale/shift).
# ----------------------------------------------------------------------------
def conv_params(key, cin, cout, k):
    k1, k2, k3, k4 = jax.random.split(key, 4)
    fan_in = cin * k * k
    w = jax.random.normal(k1, (cout, cin, k, k), jnp.float32) / np.sqrt(fan_in)
    b = 0.1 * jax.random.normal(k2, (cout,), jnp.float32)
    gamma = 1.0 + 0.1 * jax.random.normal(k3, (cout,), jnp.float32)
    beta = 0.1 * jax.random.normal(k4, (cout,), jnp.float32)
    eps = 1e-5
    scale = gamma / jnp.sqrt(1.0 + eps)          # BN eval: mean=0, var=1
    shift = beta + scale * b
    return w, scale, shift


def init_up_params(key, cin, n1x1, n3r, n3, n5r, n5, pool_proj):
    ks = jax.random.split(key, 7)
    return {
        'b1_1': conv_params(ks[0], cin, n1x1, 1),
        'b2_1': conv_params(ks[1], cin, n3r, 1),
        'b2_2': conv_params(ks[2], n3r, n3, 3),
        'b3_1': conv_params(ks[3], cin, n5r, 1),
        'b3_2': conv_params(ks[4], n5r, n5, 3),
        'b3_3': conv_params(ks[5], n5, n5, 3),
        'b4_1': conv_params(ks[6], cin, pool_proj, 1),
    }


def _prep_weights(params):
    """Fold BN scale into weights.  1x1 weights stay (Cout, Cin); 3x3 weights
    are laid out as (9*Cout, Cin) with tap-major row blocks (t = 3*ky + kx)."""
    def fold(name):
        w, scale, shift = params[name]
        return w * scale[:, None, None, None], shift.reshape(-1, 1)

    def p1x1(name):
        wf, sh = fold(name)
        return [wf[:, :, 0, 0], sh]

    def p3x3(name):
        wf, sh = fold(name)
        cout, cin = wf.shape[0], wf.shape[1]
        w9 = jnp.transpose(wf, (2, 3, 0, 1)).reshape(9 * cout, cin)
        return [w9, sh]

    return (p1x1('b1_1') + p1x1('b2_1') + p3x3('b2_2')
            + p1x1('b3_1') + p3x3('b3_2') + p3x3('b3_3') + p1x1('b4_1'))


# ----------------------------------------------------------------------------
# Public wrapper: NCHW in / NCHW out, exactly like Up.forward(x1, x2).
# ----------------------------------------------------------------------------
def up_forward(x1_nchw, x2_nchw, params):
    N, C1, h, w = x1_nchw.shape
    _, C2, H, W = x2_nchw.shape
    HW = H * W

    U = _upsample_pad_matrix(h, w, H, W)          # (h*w, HW)
    MASK, NEG = _shift_masks(H, W)                # (9,1,HW) each
    ops = _prep_weights(params)

    n1 = params['b1_1'][0].shape[0]
    n3r = params['b2_1'][0].shape[0]
    n3 = params['b2_2'][0].shape[0]
    n5r = params['b3_1'][0].shape[0]
    n5 = params['b3_3'][0].shape[0]
    pp = params['b4_1'][0].shape[0]
    ctot = n1 + n3 + n5 + pp
    cin_tot = C2 + C1

    # NCHW is already channels-major: just flatten H*W onto the lane axis.
    x1f = x1_nchw.reshape(N, C1, h * w)
    x2f = x2_nchw.reshape(N, C2, HW)

    inputs = [x1f, x2f, U, MASK, NEG] + ops

    def const_spec(arr):
        nd = arr.ndim
        return pl.BlockSpec(arr.shape, lambda n: (0,) * nd)

    in_specs = ([pl.BlockSpec((1, C1, h * w), lambda n: (n, 0, 0)),
                 pl.BlockSpec((1, C2, HW), lambda n: (n, 0, 0))]
                + [const_spec(a) for a in inputs[2:]])

    # Advisory cost estimate (matmul MACs + total bytes touched).
    def mac(m, k, nn):
        return 2 * m * k * nn
    flops_per_img = (mac(C1, h * w, HW)
                     + mac(n1, cin_tot, HW) + mac(n3r, cin_tot, HW)
                     + mac(n5r, cin_tot, HW) + mac(pp, cin_tot, HW)
                     + mac(9 * n3, n3r, HW) + mac(9 * n5, n5r, HW)
                     + mac(9 * n5, n5, HW))
    bytes_accessed = 4 * (sum(int(a.size) for a in inputs) + N * ctot * HW)
    cost = pl.CostEstimate(flops=int(N * flops_per_img), transcendentals=0,
                           bytes_accessed=int(bytes_accessed))

    kernel = _make_up_kernel(H, W)

    out = pl.pallas_call(
        kernel,
        out_shape=jax.ShapeDtypeStruct((N, ctot, HW), x2_nchw.dtype),
        grid=(N,),
        in_specs=in_specs,
        out_specs=pl.BlockSpec((1, ctot, HW), lambda n: (n, 0, 0)),
        scratch_shapes=[pltpu.VMEM((cin_tot, HW), jnp.float32)],
        compiler_params=pltpu.CompilerParams(
            dimension_semantics=("parallel",)),
        cost_estimate=cost,
    )(*inputs)

    return out.reshape(N, ctot, H, W)


# ----------------------------------------------------------------------------
# Pure-JAX/XLA reference (mirrors the PyTorch module) for verification.
# ----------------------------------------------------------------------------
def _reference_up(x1, x2, params):
    _, _, h, w = x1.shape
    _, _, H, W = x2.shape
    my = jnp.asarray(_interp_matrix(h, 2 * h))
    mx = jnp.asarray(_interp_matrix(w, 2 * w))
    up = jnp.einsum('Hh,nchw->ncHw', my, x1)
    up = jnp.einsum('Ww,ncHw->ncHW', mx, up)
    dY, dX = H - up.shape[2], W - up.shape[3]
    up = jnp.pad(up, ((0, 0), (0, 0),
                      (dY // 2, dY - dY // 2), (dX // 2, dX - dX // 2)))
    x = jnp.concatenate([x2, up], axis=1)

    def cbr(inp, p, pad):
        wgt, scale, shift = p
        wgt = wgt * scale[:, None, None, None]    # fold BN scale (eval mode)
        y = jax.lax.conv_general_dilated(
            inp, wgt, (1, 1), ((pad, pad), (pad, pad)),
            dimension_numbers=('NCHW', 'OIHW', 'NCHW'))
        return jnp.maximum(y + shift[None, :, None, None], 0.0)

    b1 = cbr(x, params['b1_1'], 0)
    b2 = cbr(cbr(x, params['b2_1'], 0), params['b2_2'], 1)
    b3 = cbr(cbr(cbr(x, params['b3_1'], 0), params['b3_2'], 1),
             params['b3_3'], 1)
    pooled = jax.lax.reduce_window(
        x, -jnp.inf, jax.lax.max, (1, 1, 3, 3), (1, 1, 1, 1),
        ((0, 0), (0, 0), (1, 1), (1, 1)))
    b4 = cbr(pooled, params['b4_1'], 0)
    return jnp.concatenate([b1, b2, b3, b4], axis=1)


# ----------------------------------------------------------------------------
if __name__ == "__main__":
    key = jax.random.PRNGKey(0)
    kx1, kx2, kp = jax.random.split(key, 3)

    N = 2
    c_half = 4
    in_channels = 2 * c_half                     # channels after cat([x2, up(x1)])
    H2, W2 = 16, 16
    n1x1, n3x3_reduce, n3x3 = 4, 4, 8
    n5x5_reduce, n5x5, pool_proj = 4, 8, 4

    x1 = jax.random.normal(kx1, (N, c_half, H2 // 2, W2 // 2), jnp.float32)
    x2 = jax.random.normal(kx2, (N, c_half, H2, W2), jnp.float32)

    params = init_up_params(kp, in_channels, n1x1, n3x3_reduce, n3x3,
                            n5x5_reduce, n5x5, pool_proj)

    out = jax.jit(up_forward)(x1, x2, params)
    jax.block_until_ready(out)

    expected = (N, n1x1 + n3x3 + n5x5 + pool_proj, H2, W2)
    assert out.shape == expected, (out.shape, expected)
    assert bool(jnp.all(jnp.isfinite(out))) and bool(jnp.all(out >= 0.0))

    ref = _reference_up(x1, x2, params)
    num = float(jnp.sqrt(jnp.sum((out - ref) ** 2)))
    den = float(jnp.sqrt(jnp.sum(ref ** 2)))
    assert den > 0.0 and num / den < 2e-2, num / den

    print("KERNEL_OK")
</pallas_src>

<mosaic_0001>
module attributes {stable_mosaic.version = 11 : i64} {
  func.func @kernel(%arg0: i32, %arg1: memref<1x4x64xf32, #tpu.memory_space<vmem>>, %arg2: memref<1x4x256xf32, #tpu.memory_space<vmem>>, %arg3: memref<64x256xf32, #tpu.memory_space<vmem>>, %arg4: memref<9x1x256xf32, #tpu.memory_space<vmem>>, %arg5: memref<9x1x256xf32, #tpu.memory_space<vmem>>, %arg6: memref<4x8xf32, #tpu.memory_space<vmem>>, %arg7: memref<4x1xf32, #tpu.memory_space<vmem>>, %arg8: memref<4x8xf32, #tpu.memory_space<vmem>>, %arg9: memref<4x1xf32, #tpu.memory_space<vmem>>, %arg10: memref<72x4xf32, #tpu.memory_space<vmem>>, %arg11: memref<8x1xf32, #tpu.memory_space<vmem>>, %arg12: memref<4x8xf32, #tpu.memory_space<vmem>>, %arg13: memref<4x1xf32, #tpu.memory_space<vmem>>, %arg14: memref<72x4xf32, #tpu.memory_space<vmem>>, %arg15: memref<8x1xf32, #tpu.memory_space<vmem>>, %arg16: memref<72x8xf32, #tpu.memory_space<vmem>>, %arg17: memref<8x1xf32, #tpu.memory_space<vmem>>, %arg18: memref<4x8xf32, #tpu.memory_space<vmem>>, %arg19: memref<4x1xf32, #tpu.memory_space<vmem>>, %arg20: memref<1x24x256xf32, #tpu.memory_space<vmem>>, %arg21: memref<8x256xf32, #tpu.memory_space<vmem>>) attributes {dimension_semantics = [#tpu.dimension_semantics<parallel>], iteration_bounds = array<i64: 2>, scalar_prefetch = 0 : i64, scratch_operands = 1 : i64, tpu.core_type = #tpu.core_type<tc>, window_params = [{transform_indices = @transform_0, window_bounds = array<i64: 1, 4, 64>}, {transform_indices = @transform_1, window_bounds = array<i64: 1, 4, 256>}, {pipeline_mode = #tpu.pipeline_mode<synchronous>, transform_indices = @transform_2, window_bounds = array<i64: 64, 256>}, {pipeline_mode = #tpu.pipeline_mode<synchronous>, transform_indices = @transform_3, window_bounds = array<i64: 9, 1, 256>}, {pipeline_mode = #tpu.pipeline_mode<synchronous>, transform_indices = @transform_4, window_bounds = array<i64: 9, 1, 256>}, {pipeline_mode = #tpu.pipeline_mode<synchronous>, transform_indices = @transform_5, window_bounds = array<i64: 4, 8>}, {pipeline_mode = #tpu.pipeline_mode<synchronous>, transform_indices = @transform_6, window_bounds = array<i64: 4, 1>}, {pipeline_mode = #tpu.pipeline_mode<synchronous>, transform_indices = @transform_7, window_bounds = array<i64: 4, 8>}, {pipeline_mode = #tpu.pipeline_mode<synchronous>, transform_indices = @transform_8, window_bounds = array<i64: 4, 1>}, {pipeline_mode = #tpu.pipeline_mode<synchronous>, transform_indices = @transform_9, window_bounds = array<i64: 72, 4>}, {pipeline_mode = #tpu.pipeline_mode<synchronous>, transform_indices = @transform_10, window_bounds = array<i64: 8, 1>}, {pipeline_mode = #tpu.pipeline_mode<synchronous>, transform_indices = @transform_11, window_bounds = array<i64: 4, 8>}, {pipeline_mode = #tpu.pipeline_mode<synchronous>, transform_indices = @transform_12, window_bounds = array<i64: 4, 1>}, {pipeline_mode = #tpu.pipeline_mode<synchronous>, transform_indices = @transform_13, window_bounds = array<i64: 72, 4>}, {pipeline_mode = #tpu.pipeline_mode<synchronous>, transform_indices = @transform_14, window_bounds = array<i64: 8, 1>}, {pipeline_mode = #tpu.pipeline_mode<synchronous>, transform_indices = @transform_15, window_bounds = array<i64: 72, 8>}, {pipeline_mode = #tpu.pipeline_mode<synchronous>, transform_indices = @transform_16, window_bounds = array<i64: 8, 1>}, {pipeline_mode = #tpu.pipeline_mode<synchronous>, transform_indices = @transform_17, window_bounds = array<i64: 4, 8>}, {pipeline_mode = #tpu.pipeline_mode<synchronous>, transform_indices = @transform_18, window_bounds = array<i64: 4, 1>}, {transform_indices = @transform_19, window_bounds = array<i64: 1, 24, 256>}]} {
    %c0 = arith.constant 0 : index
    %c0_0 = arith.constant 0 : index
    %c0_1 = arith.constant 0 : index
    %0 = vector.load %arg2[%c0, %c0_0, %c0_1] : memref<1x4x256xf32, #tpu.memory_space<vmem>>, vector<1x4x256xf32>
    %1 = vector.shape_cast %0 : vector<1x4x256xf32> to vector<4x256xf32>
    %c0_2 = arith.constant 0 : index
    %c0_3 = arith.constant 0 : index
    %2 = vector.load %arg21[%c0_2, %c0_3] : memref<8x256xf32, #tpu.memory_space<vmem>>, vector<4x256xf32>
    tpu.vector_store %arg21[%c0_2, %c0_3], %1 {strides = array<i32>} : memref<8x256xf32, #tpu.memory_space<vmem>>, vector<4x256xf32>,
    %c0_4 = arith.constant 0 : index
    %c0_5 = arith.constant 0 : index
    %c0_6 = arith.constant 0 : index
    %3 = vector.load %arg1[%c0_4, %c0_5, %c0_6] : memref<1x4x64xf32, #tpu.memory_space<vmem>>, vector<1x4x64xf32>
    %4 = vector.shape_cast %3 : vector<1x4x64xf32> to vector<4x64xf32>
    %c0_7 = arith.constant 0 : index
    %c0_8 = arith.constant 0 : index
    %5 = vector.load %arg3[%c0_7, %c0_8] : memref<64x256xf32, #tpu.memory_space<vmem>>, vector<64x256xf32>
    %cst = arith.constant dense<0.000000e+00> : vector<4x256xf32>
    %6 = tpu.matmul %4, %5, %cst {dimension_numbers = #tpu.dot_dimension_numbers<[1], [0], [0], [1], [0, 0, 1, 1], [], []>} : vector<4x64xf32>, vector<64x256xf32>, vector<4x256xf32> -> vector<4x256xf32>
    %c4 = arith.constant 4 : index
    %c0_9 = arith.constant 0 : index
    %7 = vector.load %arg21[%c4, %c0_9] : memref<8x256xf32, #tpu.memory_space<vmem>>, vector<4x256xf32>
    tpu.vector_store %arg21[%c4, %c0_9], %6 {strides = array<i32>} : memref<8x256xf32, #tpu.memory_space<vmem>>, vector<4x256xf32>,
    %c0_10 = arith.constant 0 : index
    %c0_11 = arith.constant 0 : index
    %8 = vector.load %arg21[%c0_10, %c0_11] : memref<8x256xf32, #tpu.memory_space<vmem>>, vector<8x256xf32>
    %c0_12 = arith.constant 0 : index
    %c0_13 = arith.constant 0 : index
    %9 = vector.load %arg6[%c0_12, %c0_13] : memref<4x8xf32, #tpu.memory_space<vmem>>, vector<4x8xf32>
    %cst_14 = arith.constant dense<0.000000e+00> : vector<4x256xf32>
    %10 = tpu.matmul %9, %8, %cst_14 {dimension_numbers = #tpu.dot_dimension_numbers<[1], [0], [0], [1], [0, 0, 1, 1], [], []>} : vector<4x8xf32>, vector<8x256xf32>, vector<4x256xf32> -> vector<4x256xf32>
    %c0_15 = arith.constant 0 : index
    %c0_16 = arith.constant 0 : index
    %11 = vector.load %arg7[%c0_15, %c0_16] : memref<4x1xf32, #tpu.memory_space<vmem>>, vector<4x1xf32>
    %12 = vector.broadcast %11 : vector<4x1xf32> to vector<4x256xf32>
    %13 = arith.addf %10, %12 : vector<4x256xf32>
    %cst_17 = arith.constant 0.000000e+00 : f32
    %14 = vector.broadcast %cst_17 : f32 to vector<4x256xf32>
    %15 = arith.maximumf %13, %14 : vector<4x256xf32>
    %c0_18 = arith.constant 0 : index
    %c0_19 = arith.constant 0 : index
    %16 = vector.load %arg8[%c0_18, %c0_19] : memref<4x8xf32, #tpu.memory_space<vmem>>, vector<4x8xf32>
    %cst_20 = arith.constant dense<0.000000e+00> : vector<4x256xf32>
    %17 = tpu.matmul %16, %8, %cst_20 {dimension_numbers = #tpu.dot_dimension_numbers<[1], [0], [0], [1], [0, 0, 1, 1], [], []>} : vector<4x8xf32>, vector<8x256xf32>, vector<4x256xf32> -> vector<4x256xf32>
    %c0_21 = arith.constant 0 : index
    %c0_22 = arith.constant 0 : index
    %18 = vector.load %arg9[%c0_21, %c0_22] : memref<4x1xf32, #tpu.memory_space<vmem>>, vector<4x1xf32>
    %19 = vector.broadcast %18 : vector<4x1xf32> to vector<4x256xf32>
    %20 = arith.addf %17, %19 : vector<4x256xf32>
    %cst_23 = arith.constant 0.000000e+00 : f32
    %21 = vector.broadcast %cst_23 : f32 to vector<4x256xf32>
    %22 = arith.maximumf %20, %21 : vector<4x256xf32>
    %c0_24 = arith.constant 0 : index
    %c0_25 = arith.constant 0 : index
    %23 = vector.load %arg10[%c0_24, %c0_25] : memref<72x4xf32, #tpu.memory_space<vmem>>, vector<72x4xf32>
    %cst_26 = arith.constant dense<0.000000e+00> : vector<72x256xf32>
    %24 = tpu.matmul %23, %22, %cst_26 {dimension_numbers = #tpu.dot_dimension_numbers<[1], [0], [0], [1], [0, 0, 1, 1], [], []>} : vector<72x4xf32>, vector<4x256xf32>, vector<72x256xf32> -> vector<72x256xf32>
    %25 = vector.extract_strided_slice %24 {offsets = [32, 0], sizes = [8, 256], strides = [1, 1]} : vector<72x256xf32> to vector<8x256xf32>
    %26 = vector.extract_strided_slice %24 {offsets = [0, 0], sizes = [8, 256], strides = [1, 1]} : vector<72x256xf32> to vector<8x256xf32>
    %c17_i32 = arith.constant 17 : i32
    %27 = tpu.dynamic_rotate %26 by %c17_i32 dim 1 : vector<8x256xf32>, i32 -> vector<8x256xf32>
    %c0_27 = arith.constant 0 : index
    %c0_28 = arith.constant 0 : index
    %c0_29 = arith.constant 0 : index
    %28 = vector.load %arg4[%c0_27, %c0_28, %c0_29] : memref<9x1x256xf32, #tpu.memory_space<vmem>>, vector<1x1x256xf32>
    %29 = vector.shape_cast %28 : vector<1x1x256xf32> to vector<1x256xf32>
    %30 = vector.broadcast %29 : vector<1x256xf32> to vector<8x256xf32>
    %31 = arith.mulf %27, %30 : vector<8x256xf32>
    %32 = arith.addf %25, %31 : vector<8x256xf32>
    %33 = vector.extract_strided_slice %24 {offsets = [8, 0], sizes = [8, 256], strides = [1, 1]} : vector<72x256xf32> to vector<8x256xf32>
    %c16_i32 = arith.constant 16 : i32
    %34 = tpu.dynamic_rotate %33 by %c16_i32 dim 1 : vector<8x256xf32>, i32 -> vector<8x256xf32>
    %c1 = arith.constant 1 : index
    %c0_30 = arith.constant 0 : index
    %c0_31 = arith.constant 0 : index
    %35 = vector.load %arg4[%c1, %c0_30, %c0_31] : memref<9x1x256xf32, #tpu.memory_space<vmem>>, vector<1x1x256xf32>
    %36 = vector.shape_cast %35 : vector<1x1x256xf32> to vector<1x256xf32>
    %37 = vector.broadcast %36 : vector<1x256xf32> to vector<8x256xf32>
    %38 = arith.mulf %34, %37 : vector<8x256xf32>
    %39 = arith.addf %32, %38 : vector<8x256xf32>
    %40 = vector.extract_strided_slice %24 {offsets = [16, 0], sizes = [8, 256], strides = [1, 1]} : vector<72x256xf32> to vector<8x256xf32>
    %c15_i32 = arith.constant 15 : i32
    %41 = tpu.dynamic_rotate %40 by %c15_i32 dim 1 : vector<8x256xf32>, i32 -> vector<8x256xf32>
    %c2 = arith.constant 2 : index
    %c0_32 = arith.constant 0 : index
    %c0_33 = arith.constant 0 : index
    %42 = vector.load %arg4[%c2, %c0_32, %c0_33] : memref<9x1x256xf32, #tpu.memory_space<vmem>>, vector<1x1x256xf32>
    %43 = vector.shape_cast %42 : vector<1x1x256xf32> to vector<1x256xf32>
    %44 = vector.broadcast %43 : vector<1x256xf32> to vector<8x256xf32>
    %45 = arith.mulf %41, %44 : vector<8x256xf32>
    %46 = arith.addf %39, %45 : vector<8x256xf32>
    %47 = vector.extract_strided_slice %24 {offsets = [24, 0], sizes = [8, 256], strides = [1, 1]} : vector<72x256xf32> to vector<8x256xf32>
    %c1_i32 = arith.constant 1 : i32
    %48 = tpu.dynamic_rotate %47 by %c1_i32 dim 1 : vector<8x256xf32>, i32 -> vector<8x256xf32>
    %c3 = arith.constant 3 : index
    %c0_34 = arith.constant 0 : index
    %c0_35 = arith.constant 0 : index
    %49 = vector.load %arg4[%c3, %c0_34, %c0_35] : memref<9x1x256xf32, #tpu.memory_space<vmem>>, vector<1x1x256xf32>
    %50 = vector.shape_cast %49 : vector<1x1x256xf32> to vector<1x256xf32>
    %51 = vector.broadcast %50 : vector<1x256xf32> to vector<8x256xf32>
    %52 = arith.mulf %48, %51 : vector<8x256xf32>
    %53 = arith.addf %46, %52 : vector<8x256xf32>
    %54 = vector.extract_strided_slice %24 {offsets = [40, 0], sizes = [8, 256], strides = [1, 1]} : vector<72x256xf32> to vector<8x256xf32>
    %c255_i32 = arith.constant 255 : i32
    %55 = tpu.dynamic_rotate %54 by %c255_i32 dim 1 : vector<8x256xf32>, i32 -> vector<8x256xf32>
    %c5 = arith.constant 5 : index
    %c0_36 = arith.constant 0 : index
    %c0_37 = arith.constant 0 : index
    %56 = vector.load %arg4[%c5, %c0_36, %c0_37] : memref<9x1x256xf32, #tpu.memory_space<vmem>>, vector<1x1x256xf32>
    %57 = vector.shape_cast %56 : vector<1x1x256xf32> to vector<1x256xf32>
    %58 = vector.broadcast %57 : vector<1x256xf32> to vector<8x256xf32>
    %59 = arith.mulf %55, %58 : vector<8x256xf32>
    %60 = arith.addf %53, %59 : vector<8x256xf32>
    %61 = vector.extract_strided_slice %24 {offsets = [48, 0], sizes = [8, 256], strides = [1, 1]} : vector<72x256xf32> to vector<8x256xf32>
    %c241_i32 = arith.constant 241 : i32
    %62 = tpu.dynamic_rotate %61 by %c241_i32 dim 1 : vector<8x256xf32>, i32 -> vector<8x256xf32>
    %c6 = arith.constant 6 : index
    %c0_38 = arith.constant 0 : index
    %c0_39 = arith.constant 0 : index
    %63 = vector.load %arg4[%c6, %c0_38, %c0_39] : memref<9x1x256xf32, #tpu.memory_space<vmem>>, vector<1x1x256xf32>
    %64 = vector.shape_cast %63 : vector<1x1x256xf32> to vector<1x256xf32>
    %65 = vector.broadcast %64 : vector<1x256xf32> to vector<8x256xf32>
    %66 = arith.mulf %62, %65 : vector<8x256xf32>
    %67 = arith.addf %60, %66 : vector<8x256xf32>
    %68 = vector.extract_strided_slice %24 {offsets = [56, 0], sizes = [8, 256], strides = [1, 1]} : vector<72x256xf32> to vector<8x256xf32>
    %c240_i32 = arith.constant 240 : i32
    %69 = tpu.dynamic_rotate %68 by %c240_i32 dim 1 : vector<8x256xf32>, i32 -> vector<8x256xf32>
    %c7 = arith.constant 7 : index
    %c0_40 = arith.constant 0 : index
    %c0_41 = arith.constant 0 : index
    %70 = vector.load %arg4[%c7, %c0_40, %c0_41] : memref<9x1x256xf32, #tpu.memory_space<vmem>>, vector<1x1x256xf32>
    %71 = vector.shape_cast %70 : vector<1x1x256xf32> to vector<1x256xf32>
    %72 = vector.broadcast %71 : vector<1x256xf32> to vector<8x256xf32>
    %73 = arith.mulf %69, %72 : vector<8x256xf32>
    %74 = arith.addf %67, %73 : vector<8x256xf32>
    %75 = vector.extract_strided_slice %24 {offsets = [64, 0], sizes = [8, 256], strides = [1, 1]} : vector<72x256xf32> to vector<8x256xf32>
    %c239_i32 = arith.constant 239 : i32
    %76 = tpu.dynamic_rotate %75 by %c239_i32 dim 1 : vector<8x256xf32>, i32 -> vector<8x256xf32>
    %c8 = arith.constant 8 : index
    %c0_42 = arith.constant 0 : index
    %c0_43 = arith.constant 0 : index
    %77 = vector.load %arg4[%c8, %c0_42, %c0_43] : memref<9x1x256xf32, #tpu.memory_space<vmem>>, vector<1x1x256xf32>
    %78 = vector.shape_cast %77 : vector<1x1x256xf32> to vector<1x256xf32>
    %79 = vector.broadcast %78 : vector<1x256xf32> to vector<8x256xf32>
    %80 = arith.mulf %76, %79 : vector<8x256xf32>
    %81 = arith.addf %74, %80 : vector<8x256xf32>
    %c0_44 = arith.constant 0 : index
    %c0_45 = arith.constant 0 : index
    %82 = vector.load %arg11[%c0_44, %c0_45] : memref<8x1xf32, #tpu.memory_space<vmem>>, vector<8x1xf32>
    %83 = vector.broadcast %82 : vector<8x1xf32> to vector<8x256xf32>
    %84 = arith.addf %81, %83 : vector<8x256xf32>
    %cst_46 = arith.constant 0.000000e+00 : f32
    %85 = vector.broadcast %cst_46 : f32 to vector<8x256xf32>
    %86 = arith.maximumf %84, %85 : vector<8x256xf32>
    %c0_47 = arith.constant 0 : index
    %c0_48 = arith.constant 0 : index
    %87 = vector.load %arg12[%c0_47, %c0_48] : memref<4x8xf32, #tpu.memory_space<vmem>>, vector<4x8xf32>
    %cst_49 = arith.constant dense<0.000000e+00> : vector<4x256xf32>
    %88 = tpu.matmul %87, %8, %cst_49 {dimension_numbers = #tpu.dot_dimension_numbers<[1], [0], [0], [1], [0, 0, 1, 1], [], []>} : vector<4x8xf32>, vector<8x256xf32>, vector<4x256xf32> -> vector<4x256xf32>
    %c0_50 = arith.constant 0 : index
    %c0_51 = arith.constant 0 : index
    %89 = vector.load %arg13[%c0_50, %c0_51] : memref<4x1xf32, #tpu.memory_space<vmem>>, vector<4x1xf32>
    %90 = vector.broadcast %89 : vector<4x1xf32> to vector<4x256xf32>
    %91 = arith.addf %88, %90 : vector<4x256xf32>
    %cst_52 = arith.constant 0.000000e+00 : f32
    %92 = vector.broadcast %cst_52 : f32 to vector<4x256xf32>
    %93 = arith.maximumf %91, %92 : vector<4x256xf32>
    %c0_53 = arith.constant 0 : index
    %c0_54 = arith.constant 0 : index
    %94 = vector.load %arg14[%c0_53, %c0_54] : memref<72x4xf32, #tpu.memory_space<vmem>>, vector<72x4xf32>
    %cst_55 = arith.constant dense<0.000000e+00> : vector<72x256xf32>
    %95 = tpu.matmul %94, %93, %cst_55 {dimension_numbers = #tpu.dot_dimension_numbers<[1], [0], [0], [1], [0, 0, 1, 1], [], []>} : vector<72x4xf32>, vector<4x256xf32>, vector<72x256xf32> -> vector<72x256xf32>
    %96 = vector.extract_strided_slice %95 {offsets = [32, 0], sizes = [8, 256], strides = [1, 1]} : vector<72x256xf32> to vector<8x256xf32>
    %97 = vector.extract_strided_slice %95 {offsets = [0, 0], sizes = [8, 256], strides = [1, 1]} : vector<72x256xf32> to vector<8x256xf32>
    %c17_i32_56 = arith.constant 17 : i32
    %98 = tpu.dynamic_rotate %97 by %c17_i32_56 dim 1 : vector<8x256xf32>, i32 -> vector<8x256xf32>
    %c0_57 = arith.constant 0 : index
    %c0_58 = arith.constant 0 : index
    %c0_59 = arith.constant 0 : index
    %99 = vector.load %arg4[%c0_57, %c0_58, %c0_59] : memref<9x1x256xf32, #tpu.memory_space<vmem>>, vector<1x1x256xf32>
    %100 = vector.shape_cast %99 : vector<1x1x256xf32> to vector<1x256xf32>
    %101 = vector.broadcast %100 : vector<1x256xf32> to vector<8x256xf32>
    %102 = arith.mulf %98, %101 : vector<8x256xf32>
    %103 = arith.addf %96, %102 : vector<8x256xf32>
    %104 = vector.extract_strided_slice %95 {offsets = [8, 0], sizes = [8, 256], strides = [1, 1]} : vector<72x256xf32> to vector<8x256xf32>
    %c16_i32_60 = arith.constant 16 : i32
    %105 = tpu.dynamic_rotate %104 by %c16_i32_60 dim 1 : vector<8x256xf32>, i32 -> vector<8x256xf32>
    %c1_61 = arith.constant 1 : index
    %c0_62 = arith.constant 0 : index
    %c0_63 = arith.constant 0 : index
    %106 = vector.load %arg4[%c1_61, %c0_62, %c0_63] : memref<9x1x256xf32, #tpu.memory_space<vmem>>, vector<1x1x256xf32>
    %107 = vector.shape_cast %106 : vector<1x1x256xf32> to vector<1x256xf32>
    %108 = vector.broadcast %107 : vector<1x256xf32> to vector<8x256xf32>
    %109 = arith.mulf %105, %108 : vector<8x256xf32>
    %110 = arith.addf %103, %109 : vector<8x256xf32>
    %111 = vector.extract_strided_slice %95 {offsets = [16, 0], sizes = [8, 256], strides = [1, 1]} : vector<72x256xf32> to vector<8x256xf32>
    %c15_i32_64 = arith.constant 15 : i32
    %112 = tpu.dynamic_rotate %111 by %c15_i32_64 dim 1 : vector<8x256xf32>, i32 -> vector<8x256xf32>
    %c2_65 = arith.constant 2 : index
    %c0_66 = arith.constant 0 : index
    %c0_67 = arith.constant 0 : index
    %113 = vector.load %arg4[%c2_65, %c0_66, %c0_67] : memref<9x1x256xf32, #tpu.memory_space<vmem>>, vector<1x1x256xf32>
    %114 = vector.shape_cast %113 : vector<1x1x256xf32> to vector<1x256xf32>
    %115 = vector.broadcast %114 : vector<1x256xf32> to vector<8x256xf32>
    %116 = arith.mulf %112, %115 : vector<8x256xf32>
    %117 = arith.addf %110, %116 : vector<8x256xf32>
    %118 = vector.extract_strided_slice %95 {offsets = [24, 0], sizes = [8, 256], strides = [1, 1]} : vector<72x256xf32> to vector<8x256xf32>
    %c1_i32_68 = arith.constant 1 : i32
    %119 = tpu.dynamic_rotate %118 by %c1_i32_68 dim 1 : vector<8x256xf32>, i32 -> vector<8x256xf32>
    %c3_69 = arith.constant 3 : index
    %c0_70 = arith.constant 0 : index
    %c0_71 = arith.constant 0 : index
    %120 = vector.load %arg4[%c3_69, %c0_70, %c0_71] : memref<9x1x256xf32, #tpu.memory_space<vmem>>, vector<1x1x256xf32>
    %121 = vector.shape_cast %120 : vector<1x1x256xf32> to vector<1x256xf32>
    %122 = vector.broadcast %121 : vector<1x256xf32> to vector<8x256xf32>
    %123 = arith.mulf %119, %122 : vector<8x256xf32>
    %124 = arith.addf %117, %123 : vector<8x256xf32>
    %125 = vector.extract_strided_slice %95 {offsets = [40, 0], sizes = [8, 256], strides = [1, 1]} : vector<72x256xf32> to vector<8x256xf32>
    %c255_i32_72 = arith.constant 255 : i32
    %126 = tpu.dynamic_rotate %125 by %c255_i32_72 dim 1 : vector<8x256xf32>, i32 -> vector<8x256xf32>
    %c5_73 = arith.constant 5 : index
    %c0_74 = arith.constant 0 : index
    %c0_75 = arith.constant 0 : index
    %127 = vector.load %arg4[%c5_73, %c0_74, %c0_75] : memref<9x1x256xf32, #tpu.memory_space<vmem>>, vector<1x1x256xf32>
    %128 = vector.shape_cast %127 : vector<1x1x256xf32> to vector<1x256xf32>
    %129 = vector.broadcast %128 : vector<1x256xf32> to vector<8x256xf32>
    %130 = arith.mulf %126, %129 : vector<8x256xf32>
    %131 = arith.addf %124, %130 : vector<8x256xf32>
    %132 = vector.extract_strided_slice %95 {offsets = [48, 0], sizes = [8, 256], strides = [1, 1]} : vector<72x256xf32> to vector<8x256xf32>
    %c241_i32_76 = arith.constant 241 : i32
    %133 = tpu.dynamic_rotate %132 by %c241_i32_76 dim 1 : vector<8x256xf32>, i32 -> vector<8x256xf32>
    %c6_77 = arith.constant 6 : index
    %c0_78 = arith.constant 0 : index
    %c0_79 = arith.constant 0 : index
    %134 = vector.load %arg4[%c6_77, %c0_78, %c0_79] : memref<9x1x256xf32, #tpu.memory_space<vmem>>, vector<1x1x256xf32>
    %135 = vector.shape_cast %134 : vector<1x1x256xf32> to vector<1x256xf32>
    %136 = vector.broadcast %135 : vector<1x256xf32> to vector<8x256xf32>
    %137 = arith.mulf %133, %136 : vector<8x256xf32>
    %138 = arith.addf %131, %137 : vector<8x256xf32>
    %139 = vector.extract_strided_slice %95 {offsets = [56, 0], sizes = [8, 256], strides = [1, 1]} : vector<72x256xf32> to vector<8x256xf32>
    %c240_i32_80 = arith.constant 240 : i32
    %140 = tpu.dynamic_rotate %139 by %c240_i32_80 dim 1 : vector<8x256xf32>, i32 -> vector<8x256xf32>
    %c7_81 = arith.constant 7 : index
    %c0_82 = arith.constant 0 : index
    %c0_83 = arith.constant 0 : index
    %141 = vector.load %arg4[%c7_81, %c0_82, %c0_83] : memref<9x1x256xf32, #tpu.memory_space<vmem>>, vector<1x1x256xf32>
    %142 = vector.shape_cast %141 : vector<1x1x256xf32> to vector<1x256xf32>
    %143 = vector.broadcast %142 : vector<1x256xf32> to vector<8x256xf32>
    %144 = arith.mulf %140, %143 : vector<8x256xf32>
    %145 = arith.addf %138, %144 : vector<8x256xf32>
    %146 = vector.extract_strided_slice %95 {offsets = [64, 0], sizes = [8, 256], strides = [1, 1]} : vector<72x256xf32> to vector<8x256xf32>
    %c239_i32_84 = arith.constant 239 : i32
    %147 = tpu.dynamic_rotate %146 by %c239_i32_84 dim 1 : vector<8x256xf32>, i32 -> vector<8x256xf32>
    %c8_85 = arith.constant 8 : index
    %c0_86 = arith.constant 0 : index
    %c0_87 = arith.constant 0 : index
    %148 = vector.load %arg4[%c8_85, %c0_86, %c0_87] : memref<9x1x256xf32, #tpu.memory_space<vmem>>, vector<1x1x256xf32>
    %149 = vector.shape_cast %148 : vector<1x1x256xf32> to vector<1x256xf32>
    %150 = vector.broadcast %149 : vector<1x256xf32> to vector<8x256xf32>
    %151 = arith.mulf %147, %150 : vector<8x256xf32>
    %152 = arith.addf %145, %151 : vector<8x256xf32>
    %c0_88 = arith.constant 0 : index
    %c0_89 = arith.constant 0 : index
    %153 = vector.load %arg15[%c0_88, %c0_89] : memref<8x1xf32, #tpu.memory_space<vmem>>, vector<8x1xf32>
    %154 = vector.broadcast %153 : vector<8x1xf32> to vector<8x256xf32>
    %155 = arith.addf %152, %154 : vector<8x256xf32>
    %cst_90 = arith.constant 0.000000e+00 : f32
    %156 = vector.broadcast %cst_90 : f32 to vector<8x256xf32>
    %157 = arith.maximumf %155, %156 : vector<8x256xf32>
    %c0_91 = arith.constant 0 : index
    %c0_92 = arith.constant 0 : index
    %158 = vector.load %arg16[%c0_91, %c0_92] : memref<72x8xf32, #tpu.memory_space<vmem>>, vector<72x8xf32>
    %cst_93 = arith.constant dense<0.000000e+00> : vector<72x256xf32>
    %159 = tpu.matmul %158, %157, %cst_93 {dimension_numbers = #tpu.dot_dimension_numbers<[1], [0], [0], [1], [0, 0, 1, 1], [], []>} : vector<72x8xf32>, vector<8x256xf32>, vector<72x256xf32> -> vector<72x256xf32>
    %160 = vector.extract_strided_slice %159 {offsets = [32, 0], sizes = [8, 256], strides = [1, 1]} : vector<72x256xf32> to vector<8x256xf32>
    %161 = vector.extract_strided_slice %159 {offsets = [0, 0], sizes = [8, 256], strides = [1, 1]} : vector<72x256xf32> to vector<8x256xf32>
    %c17_i32_94 = arith.constant 17 : i32
    %162 = tpu.dynamic_rotate %161 by %c17_i32_94 dim 1 : vector<8x256xf32>, i32 -> vector<8x256xf32>
    %c0_95 = arith.constant 0 : index
    %c0_96 = arith.constant 0 : index
    %c0_97 = arith.constant 0 : index
    %163 = vector.load %arg4[%c0_95, %c0_96, %c0_97] : memref<9x1x256xf32, #tpu.memory_space<vmem>>, vector<1x1x256xf32>
    %164 = vector.shape_cast %163 : vector<1x1x256xf32> to vector<1x256xf32>
    %165 = vector.broadcast %164 : vector<1x256xf32> to vector<8x256xf32>
    %166 = arith.mulf %162, %165 : vector<8x256xf32>
    %167 = arith.addf %160, %166 : vector<8x256xf32>
    %168 = vector.extract_strided_slice %159 {offsets = [8, 0], sizes = [8, 256], strides = [1, 1]} : vector<72x256xf32> to vector<8x256xf32>
    %c16_i32_98 = arith.constant 16 : i32
    %169 = tpu.dynamic_rotate %168 by %c16_i32_98 dim 1 : vector<8x256xf32>, i32 -> vector<8x256xf32>
    %c1_99 = arith.constant 1 : index
    %c0_100 = arith.constant 0 : index
    %c0_101 = arith.constant 0 : index
    %170 = vector.load %arg4[%c1_99, %c0_100, %c0_101] : memref<9x1x256xf32, #tpu.memory_space<vmem>>, vector<1x1x256xf32>
    %171 = vector.shape_cast %170 : vector<1x1x256xf32> to vector<1x256xf32>
    %172 = vector.broadcast %171 : vector<1x256xf32> to vector<8x256xf32>
    %173 = arith.mulf %169, %172 : vector<8x256xf32>
    %174 = arith.addf %167, %173 : vector<8x256xf32>
    %175 = vector.extract_strided_slice %159 {offsets = [16, 0], sizes = [8, 256], strides = [1, 1]} : vector<72x256xf32> to vector<8x256xf32>
    %c15_i32_102 = arith.constant 15 : i32
    %176 = tpu.dynamic_rotate %175 by %c15_i32_102 dim 1 : vector<8x256xf32>, i32 -> vector<8x256xf32>
    %c2_103 = arith.constant 2 : index
    %c0_104 = arith.constant 0 : index
    %c0_105 = arith.constant 0 : index
    %177 = vector.load %arg4[%c2_103, %c0_104, %c0_105] : memref<9x1x256xf32, #tpu.memory_space<vmem>>, vector<1x1x256xf32>
    %178 = vector.shape_cast %177 : vector<1x1x256xf32> to vector<1x256xf32>
    %179 = vector.broadcast %178 : vector<1x256xf32> to vector<8x256xf32>
    %180 = arith.mulf %176, %179 : vector<8x256xf32>
    %181 = arith.addf %174, %180 : vector<8x256xf32>
    %182 = vector.extract_strided_slice %159 {offsets = [24, 0], sizes = [8, 256], strides = [1, 1]} : vector<72x256xf32> to vector<8x256xf32>
    %c1_i32_106 = arith.constant 1 : i32
    %183 = tpu.dynamic_rotate %182 by %c1_i32_106 dim 1 : vector<8x256xf32>, i32 -> vector<8x256xf32>
    %c3_107 = arith.constant 3 : index
    %c0_108 = arith.constant 0 : index
    %c0_109 = arith.constant 0 : index
    %184 = vector.load %arg4[%c3_107, %c0_108, %c0_109] : memref<9x1x256xf32, #tpu.memory_space<vmem>>, vector<1x1x256xf32>
    %185 = vector.shape_cast %184 : vector<1x1x256xf32> to vector<1x256xf32>
    %186 = vector.broadcast %185 : vector<1x256xf32> to vector<8x256xf32>
    %187 = arith.mulf %183, %186 : vector<8x256xf32>
    %188 = arith.addf %181, %187 : vector<8x256xf32>
    %189 = vector.extract_strided_slice %159 {offsets = [40, 0], sizes = [8, 256], strides = [1, 1]} : vector<72x256xf32> to vector<8x256xf32>
    %c255_i32_110 = arith.constant 255 : i32
    %190 = tpu.dynamic_rotate %189 by %c255_i32_110 dim 1 : vector<8x256xf32>, i32 -> vector<8x256xf32>
    %c5_111 = arith.constant 5 : index
    %c0_112 = arith.constant 0 : index
    %c0_113 = arith.constant 0 : index
    %191 = vector.load %arg4[%c5_111, %c0_112, %c0_113] : memref<9x1x256xf32, #tpu.memory_space<vmem>>, vector<1x1x256xf32>
    %192 = vector.shape_cast %191 : vector<1x1x256xf32> to vector<1x256xf32>
    %193 = vector.broadcast %192 : vector<1x256xf32> to vector<8x256xf32>
    %194 = arith.mulf %190, %193 : vector<8x256xf32>
    %195 = arith.addf %188, %194 : vector<8x256xf32>
    %196 = vector.extract_strided_slice %159 {offsets = [48, 0], sizes = [8, 256], strides = [1, 1]} : vector<72x256xf32> to vector<8x256xf32>
    %c241_i32_114 = arith.constant 241 : i32
    %197 = tpu.dynamic_rotate %196 by %c241_i32_114 dim 1 : vector<8x256xf32>, i32 -> vector<8x256xf32>
    %c6_115 = arith.constant 6 : index
    %c0_116 = arith.constant 0 : index
    %c0_117 = arith.constant 0 : index
    %198 = vector.load %arg4[%c6_115, %c0_116, %c0_117] : memref<9x1x256xf32, #tpu.memory_space<vmem>>, vector<1x1x256xf32>
    %199 = vector.shape_cast %198 : vector<1x1x256xf32> to vector<1x256xf32>
    %200 = vector.broadcast %199 : vector<1x256xf32> to vector<8x256xf32>
    %201 = arith.mulf %197, %200 : vector<8x256xf32>
    %202 = arith.addf %195, %201 : vector<8x256xf32>
    %203 = vector.extract_strided_slice %159 {offsets = [56, 0], sizes = [8, 256], strides = [1, 1]} : vector<72x256xf32> to vector<8x256xf32>
    %c240_i32_118 = arith.constant 240 : i32
    %204 = tpu.dynamic_rotate %203 by %c240_i32_118 dim 1 : vector<8x256xf32>, i32 -> vector<8x256xf32>
    %c7_119 = arith.constant 7 : index
    %c0_120 = arith.constant 0 : index
    %c0_121 = arith.constant 0 : index
    %205 = vector.load %arg4[%c7_119, %c0_120, %c0_121] : memref<9x1x256xf32, #tpu.memory_space<vmem>>, vector<1x1x256xf32>
    %206 = vector.shape_cast %205 : vector<1x1x256xf32> to vector<1x256xf32>
    %207 = vector.broadcast %206 : vector<1x256xf32> to vector<8x256xf32>
    %208 = arith.mulf %204, %207 : vector<8x256xf32>
    %209 = arith.addf %202, %208 : vector<8x256xf32>
    %210 = vector.extract_strided_slice %159 {offsets = [64, 0], sizes = [8, 256], strides = [1, 1]} : vector<72x256xf32> to vector<8x256xf32>
    %c239_i32_122 = arith.constant 239 : i32
    %211 = tpu.dynamic_rotate %210 by %c239_i32_122 dim 1 : vector<8x256xf32>, i32 -> vector<8x256xf32>
    %c8_123 = arith.constant 8 : index
    %c0_124 = arith.constant 0 : index
    %c0_125 = arith.constant 0 : index
    %212 = vector.load %arg4[%c8_123, %c0_124, %c0_125] : memref<9x1x256xf32, #tpu.memory_space<vmem>>, vector<1x1x256xf32>
    %213 = vector.shape_cast %212 : vector<1x1x256xf32> to vector<1x256xf32>
    %214 = vector.broadcast %213 : vector<1x256xf32> to vector<8x256xf32>
    %215 = arith.mulf %211, %214 : vector<8x256xf32>
    %216 = arith.addf %209, %215 : vector<8x256xf32>
    %c0_126 = arith.constant 0 : index
    %c0_127 = arith.constant 0 : index
    %217 = vector.load %arg17[%c0_126, %c0_127] : memref<8x1xf32, #tpu.memory_space<vmem>>, vector<8x1xf32>
    %218 = vector.broadcast %217 : vector<8x1xf32> to vector<8x256xf32>
    %219 = arith.addf %216, %218 : vector<8x256xf32>
    %cst_128 = arith.constant 0.000000e+00 : f32
    %220 = vector.broadcast %cst_128 : f32 to vector<8x256xf32>
    %221 = arith.maximumf %219, %220 : vector<8x256xf32>
    %c17_i32_129 = arith.constant 17 : i32
    %222 = tpu.dynamic_rotate %8 by %c17_i32_129 dim 1 : vector<8x256xf32>, i32 -> vector<8x256xf32>
    %c0_130 = arith.constant 0 : index
    %c0_131 = arith.constant 0 : index
    %c0_132 = arith.constant 0 : index
    %223 = vector.load %arg5[%c0_130, %c0_131, %c0_132] : memref<9x1x256xf32, #tpu.memory_space<vmem>>, vector<1x1x256xf32>
    %224 = vector.shape_cast %223 : vector<1x1x256xf32> to vector<1x256xf32>
    %225 = vector.broadcast %224 : vector<1x256xf32> to vector<8x256xf32>
    %226 = arith.addf %222, %225 : vector<8x256xf32>
    %227 = arith.maximumf %8, %226 : vector<8x256xf32>
    %c16_i32_133 = arith.constant 16 : i32
    %228 = tpu.dynamic_rotate %8 by %c16_i32_133 dim 1 : vector<8x256xf32>, i32 -> vector<8x256xf32>
    %c1_134 = arith.constant 1 : index
    %c0_135 = arith.constant 0 : index
    %c0_136 = arith.constant 0 : index
    %229 = vector.load %arg5[%c1_134, %c0_135, %c0_136] : memref<9x1x256xf32, #tpu.memory_space<vmem>>, vector<1x1x256xf32>
    %230 = vector.shape_cast %229 : vector<1x1x256xf32> to vector<1x256xf32>
    %231 = vector.broadcast %230 : vector<1x256xf32> to vector<8x256xf32>
    %232 = arith.addf %228, %231 : vector<8x256xf32>
    %233 = arith.maximumf %227, %232 : vector<8x256xf32>
    %c15_i32_137 = arith.constant 15 : i32
    %234 = tpu.dynamic_rotate %8 by %c15_i32_137 dim 1 : vector<8x256xf32>, i32 -> vector<8x256xf32>
    %c2_138 = arith.constant 2 : index
    %c0_139 = arith.constant 0 : index
    %c0_140 = arith.constant 0 : index
    %235 = vector.load %arg5[%c2_138, %c0_139, %c0_140] : memref<9x1x256xf32, #tpu.memory_space<vmem>>, vector<1x1x256xf32>
    %236 = vector.shape_cast %235 : vector<1x1x256xf32> to vector<1x256xf32>
    %237 = vector.broadcast %236 : vector<1x256xf32> to vector<8x256xf32>
    %238 = arith.addf %234, %237 : vector<8x256xf32>
    %239 = arith.maximumf %233, %238 : vector<8x256xf32>
    %c1_i32_141 = arith.constant 1 : i32
    %240 = tpu.dynamic_rotate %8 by %c1_i32_141 dim 1 : vector<8x256xf32>, i32 -> vector<8x256xf32>
    %c3_142 = arith.constant 3 : index
    %c0_143 = arith.constant 0 : index
    %c0_144 = arith.constant 0 : index
    %241 = vector.load %arg5[%c3_142, %c0_143, %c0_144] : memref<9x1x256xf32, #tpu.memory_space<vmem>>, vector<1x1x256xf32>
    %242 = vector.shape_cast %241 : vector<1x1x256xf32> to vector<1x256xf32>
    %243 = vector.broadcast %242 : vector<1x256xf32> to vector<8x256xf32>
    %244 = arith.addf %240, %243 : vector<8x256xf32>
    %245 = arith.maximumf %239, %244 : vector<8x256xf32>
    %c255_i32_145 = arith.constant 255 : i32
    %246 = tpu.dynamic_rotate %8 by %c255_i32_145 dim 1 : vector<8x256xf32>, i32 -> vector<8x256xf32>
    %c5_146 = arith.constant 5 : index
    %c0_147 = arith.constant 0 : index
    %c0_148 = arith.constant 0 : index
    %247 = vector.load %arg5[%c5_146, %c0_147, %c0_148] : memref<9x1x256xf32, #tpu.memory_space<vmem>>, vector<1x1x256xf32>
    %248 = vector.shape_cast %247 : vector<1x1x256xf32> to vector<1x256xf32>
    %249 = vector.broadcast %248 : vector<1x256xf32> to vector<8x256xf32>
    %250 = arith.addf %246, %249 : vector<8x256xf32>
    %251 = arith.maximumf %245, %250 : vector<8x256xf32>
    %c241_i32_149 = arith.constant 241 : i32
    %252 = tpu.dynamic_rotate %8 by %c241_i32_149 dim 1 : vector<8x256xf32>, i32 -> vector<8x256xf32>
    %c6_150 = arith.constant 6 : index
    %c0_151 = arith.constant 0 : index
    %c0_152 = arith.constant 0 : index
    %253 = vector.load %arg5[%c6_150, %c0_151, %c0_152] : memref<9x1x256xf32, #tpu.memory_space<vmem>>, vector<1x1x256xf32>
    %254 = vector.shape_cast %253 : vector<1x1x256xf32> to vector<1x256xf32>
    %255 = vector.broadcast %254 : vector<1x256xf32> to vector<8x256xf32>
    %256 = arith.addf %252, %255 : vector<8x256xf32>
    %257 = arith.maximumf %251, %256 : vector<8x256xf32>
    %c240_i32_153 = arith.constant 240 : i32
    %258 = tpu.dynamic_rotate %8 by %c240_i32_153 dim 1 : vector<8x256xf32>, i32 -> vector<8x256xf32>
    %c7_154 = arith.constant 7 : index
    %c0_155 = arith.constant 0 : index
    %c0_156 = arith.constant 0 : index
    %259 = vector.load %arg5[%c7_154, %c0_155, %c0_156] : memref<9x1x256xf32, #tpu.memory_space<vmem>>, vector<1x1x256xf32>
    %260 = vector.shape_cast %259 : vector<1x1x256xf32> to vector<1x256xf32>
    %261 = vector.broadcast %260 : vector<1x256xf32> to vector<8x256xf32>
    %262 = arith.addf %258, %261 : vector<8x256xf32>
    %263 = arith.maximumf %257, %262 : vector<8x256xf32>
    %c239_i32_157 = arith.constant 239 : i32
    %264 = tpu.dynamic_rotate %8 by %c239_i32_157 dim 1 : vector<8x256xf32>, i32 -> vector<8x256xf32>
    %c8_158 = arith.constant 8 : index
    %c0_159 = arith.constant 0 : index
    %c0_160 = arith.constant 0 : index
    %265 = vector.load %arg5[%c8_158, %c0_159, %c0_160] : memref<9x1x256xf32, #tpu.memory_space<vmem>>, vector<1x1x256xf32>
    %266 = vector.shape_cast %265 : vector<1x1x256xf32> to vector<1x256xf32>
    %267 = vector.broadcast %266 : vector<1x256xf32> to vector<8x256xf32>
    %268 = arith.addf %264, %267 : vector<8x256xf32>
    %269 = arith.maximumf %263, %268 : vector<8x256xf32>
    %c0_161 = arith.constant 0 : index
    %c0_162 = arith.constant 0 : index
    %270 = vector.load %arg18[%c0_161, %c0_162] : memref<4x8xf32, #tpu.memory_space<vmem>>, vector<4x8xf32>
    %cst_163 = arith.constant dense<0.000000e+00> : vector<4x256xf32>
    %271 = tpu.matmul %270, %269, %cst_163 {dimension_numbers = #tpu.dot_dimension_numbers<[1], [0], [0], [1], [0, 0, 1, 1], [], []>} : vector<4x8xf32>, vector<8x256xf32>, vector<4x256xf32> -> vector<4x256xf32>
    %c0_164 = arith.constant 0 : index
    %c0_165 = arith.constant 0 : index
    %272 = vector.load %arg19[%c0_164, %c0_165] : memref<4x1xf32, #tpu.memory_space<vmem>>, vector<4x1xf32>
    %273 = vector.broadcast %272 : vector<4x1xf32> to vector<4x256xf32>
    %274 = arith.addf %271, %273 : vector<4x256xf32>
    %cst_166 = arith.constant 0.000000e+00 : f32
    %275 = vector.broadcast %cst_166 : f32 to vector<4x256xf32>
    %276 = arith.maximumf %274, %275 : vector<4x256xf32>
    %c0_167 = arith.constant 0 : index
    %c0_168 = arith.constant 0 : index
    %c0_169 = arith.constant 0 : index
    %277 = vector.load %arg20[%c0_167, %c0_168, %c0_169] : memref<1x24x256xf32, #tpu.memory_space<vmem>>, vector<1x4x256xf32>
    %278 = vector.shape_cast %277 : vector<1x4x256xf32> to vector<4x256xf32>
    %279 = vector.shape_cast %15 : vector<4x256xf32> to vector<1x4x256xf32>
    tpu.vector_store %arg20[%c0_167, %c0_168, %c0_169], %279 {strides = array<i32>} : memref<1x24x256xf32, #tpu.memory_space<vmem>>, vector<1x4x256xf32>,
    %c0_170 = arith.constant 0 : index
    %c4_171 = arith.constant 4 : index
    %c0_172 = arith.constant 0 : index
    %280 = vector.load %arg20[%c0_170, %c4_171, %c0_172] : memref<1x24x256xf32, #tpu.memory_space<vmem>>, vector<1x8x256xf32>
    %281 = vector.shape_cast %280 : vector<1x8x256xf32> to vector<8x256xf32>
    %282 = vector.shape_cast %86 : vector<8x256xf32> to vector<1x8x256xf32>
    tpu.vector_store %arg20[%c0_170, %c4_171, %c0_172], %282 {strides = array<i32>} : memref<1x24x256xf32, #tpu.memory_space<vmem>>, vector<1x8x256xf32>,
    %c0_173 = arith.constant 0 : index
    %c12 = arith.constant 12 : index
    %c0_174 = arith.constant 0 : index
    %283 = vector.load %arg20[%c0_173, %c12, %c0_174] : memref<1x24x256xf32, #tpu.memory_space<vmem>>, vector<1x8x256xf32>
    %284 = vector.shape_cast %283 : vector<1x8x256xf32> to vector<8x256xf32>
    %285 = vector.shape_cast %221 : vector<8x256xf32> to vector<1x8x256xf32>
    tpu.vector_store %arg20[%c0_173, %c12, %c0_174], %285 {strides = array<i32>} : memref<1x24x256xf32, #tpu.memory_space<vmem>>, vector<1x8x256xf32>,
    %c0_175 = arith.constant 0 : index
    %c20 = arith.constant 20 : index
    %c0_176 = arith.constant 0 : index
    %286 = vector.load %arg20[%c0_175, %c20, %c0_176] : memref<1x24x256xf32, #tpu.memory_space<vmem>>, vector<1x4x256xf32>
    %287 = vector.shape_cast %286 : vector<1x4x256xf32> to vector<4x256xf32>
    %288 = vector.shape_cast %276 : vector<4x256xf32> to vector<1x4x256xf32>
    tpu.vector_store %arg20[%c0_175, %c20, %c0_176], %288 {strides = array<i32>} : memref<1x24x256xf32, #tpu.memory_space<vmem>>, vector<1x4x256xf32>,
    return
  }
  func.func @transform_0(%arg0: i32) -> (i32, i32, i32) {
    %c0_i32 = arith.constant 0 : i32
    %c0_i32_0 = arith.constant 0 : i32
    %c0_i32_1 = arith.constant 0 : i32
    return %arg0, %c0_i32, %c0_i32_0 : i32, i32, i32
  }
  func.func @transform_1(%arg0: i32) -> (i32, i32, i32) {
    %c0_i32 = arith.constant 0 : i32
    %c0_i32_0 = arith.constant 0 : i32
    %c0_i32_1 = arith.constant 0 : i32
    return %arg0, %c0_i32, %c0_i32_0 : i32, i32, i32
  }
  func.func @transform_2(%arg0: i32) -> (i32, i32) {
    %c0_i32 = arith.constant 0 : i32
    %c0_i32_0 = arith.constant 0 : i32
    %c0_i32_1 = arith.constant 0 : i32
    return %c0_i32, %c0_i32_0 : i32, i32
  }
  func.func @transform_3(%arg0: i32) -> (i32, i32, i32) {
    %c0_i32 = arith.constant 0 : i32
    %c0_i32_0 = arith.constant 0 : i32
    %c0_i32_1 = arith.constant 0 : i32
    %c0_i32_2 = arith.constant 0 : i32
    return %c0_i32, %c0_i32_0, %c0_i32_1 : i32, i32, i32
  }
  func.func @transform_4(%arg0: i32) -> (i32, i32, i32) {
    %c0_i32 = arith.constant 0 : i32
    %c0_i32_0 = arith.constant 0 : i32
    %c0_i32_1 = arith.constant 0 : i32
    %c0_i32_2 = arith.constant 0 : i32
    return %c0_i32, %c0_i32_0, %c0_i32_1 : i32, i32, i32
  }
  func.func @transform_5(%arg0: i32) -> (i32, i32) {
    %c0_i32 = arith.constant 0 : i32
    %c0_i32_0 = arith.constant 0 : i32
    %c0_i32_1 = arith.constant 0 : i32
    return %c0_i32, %c0_i32_0 : i32, i32
  }
  func.func @transform_6(%arg0: i32) -> (i32, i32) {
    %c0_i32 = arith.constant 0 : i32
    %c0_i32_0 = arith.constant 0 : i32
    %c0_i32_1 = arith.constant 0 : i32
    return %c0_i32, %c0_i32_0 : i32, i32
  }
  func.func @transform_7(%arg0: i32) -> (i32, i32) {
    %c0_i32 = arith.constant 0 : i32
    %c0_i32_0 = arith.constant 0 : i32
    %c0_i32_1 = arith.constant 0 : i32
    return %c0_i32, %c0_i32_0 : i32, i32
  }
  func.func @transform_8(%arg0: i32) -> (i32, i32) {
    %c0_i32 = arith.constant 0 : i32
    %c0_i32_0 = arith.constant 0 : i32
    %c0_i32_1 = arith.constant 0 : i32
    return %c0_i32, %c0_i32_0 : i32, i32
  }
  func.func @transform_9(%arg0: i32) -> (i32, i32) {
    %c0_i32 = arith.constant 0 : i32
    %c0_i32_0 = arith.constant 0 : i32
    %c0_i32_1 = arith.constant 0 : i32
    return %c0_i32, %c0_i32_0 : i32, i32
  }
  func.func @transform_10(%arg0: i32) -> (i32, i32) {
    %c0_i32 = arith.constant 0 : i32
    %c0_i32_0 = arith.constant 0 : i32
    %c0_i32_1 = arith.constant 0 : i32
    return %c0_i32, %c0_i32_0 : i32, i32
  }
  func.func @transform_11(%arg0: i32) -> (i32, i32) {
    %c0_i32 = arith.constant 0 : i32
    %c0_i32_0 = arith.constant 0 : i32
    %c0_i32_1 = arith.constant 0 : i32
    return %c0_i32, %c0_i32_0 : i32, i32
  }
  func.func @transform_12(%arg0: i32) -> (i32, i32) {
    %c0_i32 = arith.constant 0 : i32
    %c0_i32_0 = arith.constant 0 : i32
    %c0_i32_1 = arith.constant 0 : i32
    return %c0_i32, %c0_i32_0 : i32, i32
  }
  func.func @transform_13(%arg0: i32) -> (i32, i32) {
    %c0_i32 = arith.constant 0 : i32
    %c0_i32_0 = arith.constant 0 : i32
    %c0_i32_1 = arith.constant 0 : i32
    return %c0_i32, %c0_i32_0 : i32, i32
  }
  func.func @transform_14(%arg0: i32) -> (i32, i32) {
    %c0_i32 = arith.constant 0 : i32
    %c0_i32_0 = arith.constant 0 : i32
    %c0_i32_1 = arith.constant 0 : i32
    return %c0_i32, %c0_i32_0 : i32, i32
  }
  func.func @transform_15(%arg0: i32) -> (i32, i32) {
    %c0_i32 = arith.constant 0 : i32
    %c0_i32_0 = arith.constant 0 : i32
    %c0_i32_1 = arith.constant 0 : i32
    return %c0_i32, %c0_i32_0 : i32, i32
  }
  func.func @transform_16(%arg0: i32) -> (i32, i32) {
    %c0_i32 = arith.constant 0 : i32
    %c0_i32_0 = arith.constant 0 : i32
    %c0_i32_1 = arith.constant 0 : i32
    return %c0_i32, %c0_i32_0 : i32, i32
  }
  func.func @transform_17(%arg0: i32) -> (i32, i32) {
    %c0_i32 = arith.constant 0 : i32
    %c0_i32_0 = arith.constant 0 : i32
    %c0_i32_1 = arith.constant 0 : i32
    return %c0_i32, %c0_i32_0 : i32, i32
  }
  func.func @transform_18(%arg0: i32) -> (i32, i32) {
    %c0_i32 = arith.constant 0 : i32
    %c0_i32_0 = arith.constant 0 : i32
    %c0_i32_1 = arith.constant 0 : i32
    return %c0_i32, %c0_i32_0 : i32, i32
  }
  func.func @transform_19(%arg0: i32) -> (i32, i32, i32) {
    %c0_i32 = arith.constant 0 : i32
    %c0_i32_0 = arith.constant 0 : i32
    %c0_i32_1 = arith.constant 0 : i32
    return %arg0, %c0_i32, %c0_i32_0 : i32, i32, i32
  }
}

</mosaic_0001>

<llo_original>
// kernel: up_forward.1
$region0: #{up_forward.1}
  #allocation0 [shape = 'u32[]', space=smem, size = 0x4, offset = 0x4, fixed_abs, tag = 'smem constant byte address 0x4 - core index']
  #allocation1 [shape = 'u32[72,128]{1,0:T(1,128)}', space=vmem, size = 0x9000, scoped, tag = 'internal scratch']
  #allocation2 [shape = 'f32[8,256]{1,0:T(8,128)}', space=vmem, size = 0x2000, scoped, tag = 'scratch operand']
  %s0 = inlined_call_operand.vmem [shape: f32[2,4,64], index: 0, kind: input, shape index: {}]
  %s1 = inlined_call_operand.vmem [shape: f32[2,4,256], index: 1, kind: input, shape index: {}]
  %s2 = inlined_call_operand.vmem [shape: f32[64,256], index: 2, kind: input, shape index: {}]
  %s3 = inlined_call_operand.vmem [shape: f32[9,1,256], index: 3, kind: input, shape index: {}]
  %s4 = inlined_call_operand.vmem [shape: f32[9,1,256], index: 4, kind: input, shape index: {}]
  %s5 = inlined_call_operand.vmem [shape: f32[4,8], index: 5, kind: input, shape index: {}]
  %s6 = inlined_call_operand.vmem [shape: f32[4,1], index: 6, kind: input, shape index: {}]
  %s7 = inlined_call_operand.vmem [shape: f32[4,8], index: 7, kind: input, shape index: {}]
  %s8 = inlined_call_operand.vmem [shape: f32[4,1], index: 8, kind: input, shape index: {}]
  %s9 = inlined_call_operand.vmem [shape: f32[72,4], index: 9, kind: input, shape index: {}]
  %s10 = inlined_call_operand.vmem [shape: f32[8,1], index: 10, kind: input, shape index: {}]
  %s11 = inlined_call_operand.vmem [shape: f32[4,8], index: 11, kind: input, shape index: {}]
  %s12 = inlined_call_operand.vmem [shape: f32[4,1], index: 12, kind: input, shape index: {}]
  %s13 = inlined_call_operand.vmem [shape: f32[72,4], index: 13, kind: input, shape index: {}]
  %s14 = inlined_call_operand.vmem [shape: f32[8,1], index: 14, kind: input, shape index: {}]
  %s15 = inlined_call_operand.vmem [shape: f32[72,8], index: 15, kind: input, shape index: {}]
  %s16 = inlined_call_operand.vmem [shape: f32[8,1], index: 16, kind: input, shape index: {}]
  %s17 = inlined_call_operand.vmem [shape: f32[4,8], index: 17, kind: input, shape index: {}]
  %s18 = inlined_call_operand.vmem [shape: f32[4,1], index: 18, kind: input, shape index: {}]
  %s19 = inlined_call_operand.vmem [shape: f32[2,24,256], index: 19, kind: output, shape index: {}]
  %s20 = sld [smem:[#allocation0]]
  $region109: #{up_forward.1} parent=0
    _
  %s22 = ssub.s32 1, %s20
  %s23 = scalar_select 0, %s22, %s20
  loop: start=0, step=1, limit=4
  $region2: #{up_forward.1} parent=0 // loop_pre_header
    _
  $region3: #{up_forward.1} parent=0 // loop_header
    %s25 = sphi 0, %s29
    %p26 = scmp.ge.s32.totalorder %s25, 4
    %s35 = sphi 0, %s37
    %s38 = sphi 0, %s35
    %s39 = sphi 0, %s38
    %s55 = sphi 0, %s39
    %s61 = sphi 0, %s63
    %s64 = sphi 0, %s61
    %s65 = sphi 0, %s64
    %s81 = sphi 0, %s65
    %s85 = sphi 0, %s85
    %s87 = sphi 0, %s85
    %s88 = sphi 0, %s87
    %s102 = sphi 0, %s88
    %s106 = sphi 0, %s106
    %s108 = sphi 0, %s106
    %s109 = sphi 0, %s108
    %s123 = sphi 0, %s109
    %s127 = sphi 0, %s127
    %s129 = sphi 0, %s127
    %s130 = sphi 0, %s129
    %s144 = sphi 0, %s130
    %s148 = sphi 0, %s148
    %s150 = sphi 0, %s148
    %s151 = sphi 0, %s150
    %s165 = sphi 0, %s151
    %s169 = sphi 0, %s169
    %s171 = sphi 0, %s169
    %s172 = sphi 0, %s171
    %s186 = sphi 0, %s172
    %s190 = sphi 0, %s190
    %s192 = sphi 0, %s190
    %s193 = sphi 0, %s192
    %s207 = sphi 0, %s193
    %s211 = sphi 0, %s211
    %s213 = sphi 0, %s211
    %s214 = sphi 0, %s213
    %s228 = sphi 0, %s214
    %s232 = sphi 0, %s232
    %s234 = sphi 0, %s232
    %s235 = sphi 0, %s234
    %s249 = sphi 0, %s235
    %s253 = sphi 0, %s253
    %s255 = sphi 0, %s253
    %s256 = sphi 0, %s255
    %s270 = sphi 0, %s256
    %s274 = sphi 0, %s274
    %s276 = sphi 0, %s274
    %s277 = sphi 0, %s276
    %s291 = sphi 0, %s277
    %s295 = sphi 0, %s295
    %s297 = sphi 0, %s295
    %s298 = sphi 0, %s297
    %s312 = sphi 0, %s298
    %s316 = sphi 0, %s316
    %s318 = sphi 0, %s316
    %s319 = sphi 0, %s318
    %s333 = sphi 0, %s319
    %s337 = sphi 0, %s337
    %s339 = sphi 0, %s337
    %s340 = sphi 0, %s339
    %s354 = sphi 0, %s340
    %s358 = sphi 0, %s358
    %s360 = sphi 0, %s358
    %s361 = sphi 0, %s360
    %s375 = sphi 0, %s361
    %s379 = sphi 0, %s379
    %s381 = sphi 0, %s379
    %s382 = sphi 0, %s381
    %s396 = sphi 0, %s382
    %s400 = sphi 0, %s400
    %s402 = sphi 0, %s400
    %s403 = sphi 0, %s402
    %s417 = sphi 0, %s403
    %s421 = sphi 0, %s421
    %s423 = sphi 0, %s421
    %s424 = sphi 0, %s423
    %s438 = sphi 0, %s424
    %s444 = sphi 0, %s446
    %s447 = sphi 0, %s444
    %s448 = sphi 0, %s447
    %s464 = sphi 0, %s448
  $region4: #{up_forward.1} parent=0 // loop_header_branch
    %28 = sbr.rel (%p26) target = $region8
  $region5: #{up_forward.1} parent=0 // loop_body
    %s30 = ssub.s32 %s25, 1
    %s31 = ssub.s32 %s25, 2
    %s32 = sadd.s32 %s25, 1
    %s33 = ssub.s32 %s25, %s32
    %p34 = scmp.eq.s32.totalorder %s33, 0
    %s36 = sadd.s32 %s35, 1
    %s37 = scalar_select %p34, %s35, %s36
    %p40 = pneg %p34
    %p41 = scmp.eq.s32.totalorder %s25, 1
    %p42 = por %p40, %p41
    %p43 = scmp.ne.s32.totalorder %s35, %s38
    %p44 = scmp.eq.s32.totalorder %s25, 0
    %p45 = por %p43, %p44
    %p46 = scmp.ne.s32.totalorder %s35, %s38
    %p47 = scmp.eq.s32.totalorder %s30, 1
    %p48 = por %p46, %p47
    %p49 = scmp.ne.s32.totalorder %s38, %s39
    %p50 = scmp.eq.s32.totalorder %s30, 0
    %p51 = por %p49, %p50
    %p52 = scmp.ne.s32.totalorder %s38, %s39
    %p53 = scmp.eq.s32.totalorder %s31, 1
    %p54 = por %p52, %p53
    %p56 = scmp.ne.s32.totalorder %s39, %s55
    %p57 = scmp.eq.s32.totalorder %s31, 0
    %p58 = por %p56, %p57
    %s59 = ssub.s32 %s25, %s32
    %p60 = scmp.eq.s32.totalorder %s59, 0
    %s62 = sadd.s32 %s61, 1
    %s63 = scalar_select %p60, %s61, %s62
    %p66 = pneg %p60
    %p67 = scmp.eq.s32.totalorder %s25, 1
    %p68 = por %p66, %p67
    %p69 = scmp.ne.s32.totalorder %s61, %s64
    %p70 = scmp.eq.s32.totalorder %s25, 0
    %p71 = por %p69, %p70
    %p72 = scmp.ne.s32.totalorder %s61, %s64
    %p73 = scmp.eq.s32.totalorder %s30, 1
    %p74 = por %p72, %p73
    %p75 = scmp.ne.s32.totalorder %s64, %s65
    %p76 = scmp.eq.s32.totalorder %s30, 0
    %p77 = por %p75, %p76
    %p78 = scmp.ne.s32.totalorder %s64, %s65
    %p79 = scmp.eq.s32.totalorder %s31, 1
    %p80 = por %p78, %p79
    %p82 = scmp.ne.s32.totalorder %s65, %s81
    %p83 = scmp.eq.s32.totalorder %s31, 0
    %p84 = por %p82, %p83
    %s86 = sadd.s32 %s85, 1
    %p89 = scmp.eq.s32.totalorder %s25, 1
    %p90 = scmp.ne.s32.totalorder %s85, %s87
    %p91 = scmp.eq.s32.totalorder %s25, 0
    %p92 = por %p90, %p91
    %p93 = scmp.ne.s32.totalorder %s85, %s87
    %p94 = scmp.eq.s32.totalorder %s30, 1
    %p95 = por %p93, %p94
    %p96 = scmp.ne.s32.totalorder %s87, %s88
    %p97 = scmp.eq.s32.totalorder %s30, 0
    %p98 = por %p96, %p97
    %p99 = scmp.ne.s32.totalorder %s87, %s88
    %p100 = scmp.eq.s32.totalorder %s31, 1
    %p101 = por %p99, %p100
    %p103 = scmp.ne.s32.totalorder %s88, %s102
    %p104 = scmp.eq.s32.totalorder %s31, 0
    %p105 = por %p103, %p104
    %s107 = sadd.s32 %s106, 1
    %p110 = scmp.eq.s32.totalorder %s25, 1
    %p111 = scmp.ne.s32.totalorder %s106, %s108
    %p112 = scmp.eq.s32.totalorder %s25, 0
    %p113 = por %p111, %p112
    %p114 = scmp.ne.s32.totalorder %s106, %s108
    %p115 = scmp.eq.s32.totalorder %s30, 1
    %p116 = por %p114, %p115
    %p117 = scmp.ne.s32.totalorder %s108, %s109
    %p118 = scmp.eq.s32.totalorder %s30, 0
    %p119 = por %p117, %p118
    %p120 = scmp.ne.s32.totalorder %s108, %s109
    %p121 = scmp.eq.s32.totalorder %s31, 1
    %p122 = por %p120, %p121
    %p124 = scmp.ne.s32.totalorder %s109, %s123
    %p125 = scmp.eq.s32.totalorder %s31, 0
    %p126 = por %p124, %p125
    %s128 = sadd.s32 %s127, 1
    %p131 = scmp.eq.s32.totalorder %s25, 1
    %p132 = scmp.ne.s32.totalorder %s127, %s129
    %p133 = scmp.eq.s32.totalorder %s25, 0
    %p134 = por %p132, %p133
    %p135 = scmp.ne.s32.totalorder %s127, %s129
    %p136 = scmp.eq.s32.totalorder %s30, 1
    %p137 = por %p135, %p136
    %p138 = scmp.ne.s32.totalorder %s129, %s130
    %p139 = scmp.eq.s32.totalorder %s30, 0
    %p140 = por %p138, %p139
    %p141 = scmp.ne.s32.totalorder %s129, %s130
    %p142 = scmp.eq.s32.totalorder %s31, 1
    %p143 = por %p141, %p142
    %p145 = scmp.ne.s32.totalorder %s130, %s144
    %p146 = scmp.eq.s32.totalorder %s31, 0
    %p147 = por %p145, %p146
    %s149 = sadd.s32 %s148, 1
    %p152 = scmp.eq.s32.totalorder %s25, 1
    %p153 = scmp.ne.s32.totalorder %s148, %s150
    %p154 = scmp.eq.s32.totalorder %s25, 0
    %p155 = por %p153, %p154
    %p156 = scmp.ne.s32.totalorder %s148, %s150
    %p157 = scmp.eq.s32.totalorder %s30, 1
    %p158 = por %p156, %p157
    %p159 = scmp.ne.s32.totalorder %s150, %s151
    %p160 = scmp.eq.s32.totalorder %s30, 0
    %p161 = por %p159, %p160
    %p162 = scmp.ne.s32.totalorder %s150, %s151
    %p163 = scmp.eq.s32.totalorder %s31, 1
    %p164 = por %p162, %p163
    %p166 = scmp.ne.s32.totalorder %s151, %s165
    %p167 = scmp.eq.s32.totalorder %s31, 0
    %p168 = por %p166, %p167
    %s170 = sadd.s32 %s169, 1
    %p173 = scmp.eq.s32.totalorder %s25, 1
    %p174 = scmp.ne.s32.totalorder %s169, %s171
    %p175 = scmp.eq.s32.totalorder %s25, 0
    %p176 = por %p174, %p175
    %p177 = scmp.ne.s32.totalorder %s169, %s171
    %p178 = scmp.eq.s32.totalorder %s30, 1
    %p179 = por %p177, %p178
    %p180 = scmp.ne.s32.totalorder %s171, %s172
    %p181 = scmp.eq.s32.totalorder %s30, 0
    %p182 = por %p180, %p181
    %p183 = scmp.ne.s32.totalorder %s171, %s172
    %p184 = scmp.eq.s32.totalorder %s31, 1
    %p185 = por %p183, %p184
    %p187 = scmp.ne.s32.totalorder %s172, %s186
    %p188 = scmp.eq.s32.totalorder %s31, 0
    %p189 = por %p187, %p188
    %s191 = sadd.s32 %s190, 1
    %p194 = scmp.eq.s32.totalorder %s25, 1
    %p195 = scmp.ne.s32.totalorder %s190, %s192
    %p196 = scmp.eq.s32.totalorder %s25, 0
    %p197 = por %p195, %p196
    %p198 = scmp.ne.s32.totalorder %s190, %s192
    %p199 = scmp.eq.s32.totalorder %s30, 1
    %p200 = por %p198, %p199
    %p201 = scmp.ne.s32.totalorder %s192, %s193
    %p202 = scmp.eq.s32.totalorder %s30, 0
    %p203 = por %p201, %p202
    %p204 = scmp.ne.s32.totalorder %s192, %s193
    %p205 = scmp.eq.s32.totalorder %s31, 1
    %p206 = por %p204, %p205
    %p208 = scmp.ne.s32.totalorder %s193, %s207
    %p209 = scmp.eq.s32.totalorder %s31, 0
    %p210 = por %p208, %p209
    %s212 = sadd.s32 %s211, 1
    %p215 = scmp.eq.s32.totalorder %s25, 1
    %p216 = scmp.ne.s32.totalorder %s211, %s213
    %p217 = scmp.eq.s32.totalorder %s25, 0
    %p218 = por %p216, %p217
    %p219 = scmp.ne.s32.totalorder %s211, %s213
    %p220 = scmp.eq.s32.totalorder %s30, 1
    %p221 = por %p219, %p220
    %p222 = scmp.ne.s32.totalorder %s213, %s214
    %p223 = scmp.eq.s32.totalorder %s30, 0
    %p224 = por %p222, %p223
    %p225 = scmp.ne.s32.totalorder %s213, %s214
    %p226 = scmp.eq.s32.totalorder %s31, 1
    %p227 = por %p225, %p226
    %p229 = scmp.ne.s32.totalorder %s214, %s228
    %p230 = scmp.eq.s32.totalorder %s31, 0
    %p231 = por %p229, %p230
    %s233 = sadd.s32 %s232, 1
    %p236 = scmp.eq.s32.totalorder %s25, 1
    %p237 = scmp.ne.s32.totalorder %s232, %s234
    %p238 = scmp.eq.s32.totalorder %s25, 0
    %p239 = por %p237, %p238
    %p240 = scmp.ne.s32.totalorder %s232, %s234
    %p241 = scmp.eq.s32.totalorder %s30, 1
    %p242 = por %p240, %p241
    %p243 = scmp.ne.s32.totalorder %s234, %s235
    %p244 = scmp.eq.s32.totalorder %s30, 0
    %p245 = por %p243, %p244
    %p246 = scmp.ne.s32.totalorder %s234, %s235
    %p247 = scmp.eq.s32.totalorder %s31, 1
    %p248 = por %p246, %p247
    %p250 = scmp.ne.s32.totalorder %s235, %s249
    %p251 = scmp.eq.s32.totalorder %s31, 0
    %p252 = por %p250, %p251
    %s254 = sadd.s32 %s253, 1
    %p257 = scmp.eq.s32.totalorder %s25, 1
    %p258 = scmp.ne.s32.totalorder %s253, %s255
    %p259 = scmp.eq.s32.totalorder %s25, 0
    %p260 = por %p258, %p259
    %p261 = scmp.ne.s32.totalorder %s253, %s255
    %p262 = scmp.eq.s32.totalorder %s30, 1
    %p263 = por %p261, %p262
    %p264 = scmp.ne.s32.totalorder %s255, %s256
    %p265 = scmp.eq.s32.totalorder %s30, 0
    %p266 = por %p264, %p265
    %p267 = scmp.ne.s32.totalorder %s255, %s256
    %p268 = scmp.eq.s32.totalorder %s31, 1
    %p269 = por %p267, %p268
    %p271 = scmp.ne.s32.totalorder %s256, %s270
    %p272 = scmp.eq.s32.totalorder %s31, 0
    %p273 = por %p271, %p272
    %s275 = sadd.s32 %s274, 1
    %p278 = scmp.eq.s32.totalorder %s25, 1
    %p279 = scmp.ne.s32.totalorder %s274, %s276
    %p280 = scmp.eq.s32.totalorder %s25, 0
    %p281 = por %p279, %p280
    %p282 = scmp.ne.s32.totalorder %s274, %s276
    %p283 = scmp.eq.s32.totalorder %s30, 1
    %p284 = por %p282, %p283
    %p285 = scmp.ne.s32.totalorder %s276, %s277
    %p286 = scmp.eq.s32.totalorder %s30, 0
    %p287 = por %p285, %p286
    %p288 = scmp.ne.s32.totalorder %s276, %s277
    %p289 = scmp.eq.s32.totalorder %s31, 1
    %p290 = por %p288, %p289
    %p292 = scmp.ne.s32.totalorder %s277, %s291
    %p293 = scmp.eq.s32.totalorder %s31, 0
    %p294 = por %p292, %p293
    %s296 = sadd.s32 %s295, 1
    %p299 = scmp.eq.s32.totalorder %s25, 1
    %p300 = scmp.ne.s32.totalorder %s295, %s297
    %p301 = scmp.eq.s32.totalorder %s25, 0
    %p302 = por %p300, %p301
    %p303 = scmp.ne.s32.totalorder %s295, %s297
    %p304 = scmp.eq.s32.totalorder %s30, 1
    %p305 = por %p303, %p304
    %p306 = scmp.ne.s32.totalorder %s297, %s298
    %p307 = scmp.eq.s32.totalorder %s30, 0
    %p308 = por %p306, %p307
    %p309 = scmp.ne.s32.totalorder %s297, %s298
    %p310 = scmp.eq.s32.totalorder %s31, 1
    %p311 = por %p309, %p310
    %p313 = scmp.ne.s32.totalorder %s298, %s312
    %p314 = scmp.eq.s32.totalorder %s31, 0
    %p315 = por %p313, %p314
    %s317 = sadd.s32 %s316, 1
    %p320 = scmp.eq.s32.totalorder %s25, 1
    %p321 = scmp.ne.s32.totalorder %s316, %s318
    %p322 = scmp.eq.s32.totalorder %s25, 0
    %p323 = por %p321, %p322
    %p324 = scmp.ne.s32.totalorder %s316, %s318
    %p325 = scmp.eq.s32.totalorder %s30, 1
    %p326 = por %p324, %p325
    %p327 = scmp.ne.s32.totalorder %s318, %s319
    %p328 = scmp.eq.s32.totalorder %s30, 0
    %p329 = por %p327, %p328
    %p330 = scmp.ne.s32.totalorder %s318, %s319
    %p331 = scmp.eq.s32.totalorder %s31, 1
    %p332 = por %p330, %p331
    %p334 = scmp.ne.s32.totalorder %s319, %s333
    %p335 = scmp.eq.s32.totalorder %s31, 0
    %p336 = por %p334, %p335
    %s338 = sadd.s32 %s337, 1
    %p341 = scmp.eq.s32.totalorder %s25, 1
    %p342 = scmp.ne.s32.totalorder %s337, %s339
    %p343 = scmp.eq.s32.totalorder %s25, 0
    %p344 = por %p342, %p343
    %p345 = scmp.ne.s32.totalorder %s337, %s339
    %p346 = scmp.eq.s32.totalorder %s30, 1
    %p347 = por %p345, %p346
    %p348 = scmp.ne.s32.totalorder %s339, %s340
    %p349 = scmp.eq.s32.totalorder %s30, 0
    %p350 = por %p348, %p349
    %p351 = scmp.ne.s32.totalorder %s339, %s340
    %p352 = scmp.eq.s32.totalorder %s31, 1
    %p353 = por %p351, %p352
    %p355 = scmp.ne.s32.totalorder %s340, %s354
    %p356 = scmp.eq.s32.totalorder %s31, 0
    %p357 = por %p355, %p356
    %s359 = sadd.s32 %s358, 1
    %p362 = scmp.eq.s32.totalorder %s25, 1
    %p363 = scmp.ne.s32.totalorder %s358, %s360
    %p364 = scmp.eq.s32.totalorder %s25, 0
    %p365 = por %p363, %p364
    %p366 = scmp.ne.s32.totalorder %s358, %s360
    %p367 = scmp.eq.s32.totalorder %s30, 1
    %p368 = por %p366, %p367
    %p369 = scmp.ne.s32.totalorder %s360, %s361
    %p370 = scmp.eq.s32.totalorder %s30, 0
    %p371 = por %p369, %p370
    %p372 = scmp.ne.s32.totalorder %s360, %s361
    %p373 = scmp.eq.s32.totalorder %s31, 1
    %p374 = por %p372, %p373
    %p376 = scmp.ne.s32.totalorder %s361, %s375
    %p377 = scmp.eq.s32.totalorder %s31, 0
    %p378 = por %p376, %p377
    %s380 = sadd.s32 %s379, 1
    %p383 = scmp.eq.s32.totalorder %s25, 1
    %p384 = scmp.ne.s32.totalorder %s379, %s381
    %p385 = scmp.eq.s32.totalorder %s25, 0
    %p386 = por %p384, %p385
    %p387 = scmp.ne.s32.totalorder %s379, %s381
    %p388 = scmp.eq.s32.totalorder %s30, 1
    %p389 = por %p387, %p388
    %p390 = scmp.ne.s32.totalorder %s381, %s382
    %p391 = scmp.eq.s32.totalorder %s30, 0
    %p392 = por %p390, %p391
    %p393 = scmp.ne.s32.totalorder %s381, %s382
    %p394 = scmp.eq.s32.totalorder %s31, 1
    %p395 = por %p393, %p394
    %p397 = scmp.ne.s32.totalorder %s382, %s396
    %p398 = scmp.eq.s32.totalorder %s31, 0
    %p399 = por %p397, %p398
    %s401 = sadd.s32 %s400, 1
    %p404 = scmp.eq.s32.totalorder %s25, 1
    %p405 = scmp.ne.s32.totalorder %s400, %s402
    %p406 = scmp.eq.s32.totalorder %s25, 0
    %p407 = por %p405, %p406
    %p408 = scmp.ne.s32.totalorder %s400, %s402
    %p409 = scmp.eq.s32.totalorder %s30, 1
    %p410 = por %p408, %p409
    %p411 = scmp.ne.s32.totalorder %s402, %s403
    %p412 = scmp.eq.s32.totalorder %s30, 0
    %p413 = por %p411, %p412
    %p414 = scmp.ne.s32.totalorder %s402, %s403
    %p415 = scmp.eq.s32.totalorder %s31, 1
    %p416 = por %p414, %p415
    %p418 = scmp.ne.s32.totalorder %s403, %s417
    %p419 = scmp.eq.s32.totalorder %s31, 0
    %p420 = por %p418, %p419
    %s422 = sadd.s32 %s421, 1
    %p425 = scmp.eq.s32.totalorder %s25, 1
    %p426 = scmp.ne.s32.totalorder %s421, %s423
    %p427 = scmp.eq.s32.totalorder %s25, 0
    %p428 = por %p426, %p427
    %p429 = scmp.ne.s32.totalorder %s421, %s423
    %p430 = scmp.eq.s32.totalorder %s30, 1
    %p431 = por %p429, %p430
    %p432 = scmp.ne.s32.totalorder %s423, %s424
    %p433 = scmp.eq.s32.totalorder %s30, 0
    %p434 = por %p432, %p433
    %p435 = scmp.ne.s32.totalorder %s423, %s424
    %p436 = scmp.eq.s32.totalorder %s31, 1
    %p437 = por %p435, %p436
    %p439 = scmp.ne.s32.totalorder %s424, %s438
    %p440 = scmp.eq.s32.totalorder %s31, 0
    %p441 = por %p439, %p440
    %s442 = ssub.s32 %s25, %s32
    %p443 = scmp.eq.s32.totalorder %s442, 0
    %s445 = sadd.s32 %s444, 1
    %s446 = scalar_select %p443, %s444, %s445
    %p449 = pneg %p443
    %p450 = scmp.eq.s32.totalorder %s25, 1
    %p451 = por %p449, %p450
    %p452 = scmp.ne.s32.totalorder %s444, %s447
    %p453 = scmp.eq.s32.totalorder %s25, 0
    %p454 = por %p452, %p453
    %p455 = scmp.ne.s32.totalorder %s444, %s447
    %p456 = scmp.eq.s32.totalorder %s30, 1
    %p457 = por %p455, %p456
    %p458 = scmp.ne.s32.totalorder %s447, %s448
    %p459 = scmp.eq.s32.totalorder %s30, 0
    %p460 = por %p458, %p459
    %p461 = scmp.ne.s32.totalorder %s447, %s448
    %p462 = scmp.eq.s32.totalorder %s31, 1
    %p463 = por %p461, %p462
    %p465 = scmp.ne.s32.totalorder %s448, %s464
    %p466 = scmp.eq.s32.totalorder %s31, 0
    %p467 = por %p465, %p466
    %p468 = scmp.le.s32.totalorder 1, %s25
    %p469 = scmp.lt.s32.totalorder %s25, 3
    %p470 = pnand %p468, %p469
    %p471 = pneg %p470
    // Predicated region
    $region9: #{up_forward.1} parent=5 // pred_check
      _
    $region10: #{up_forward.1} parent=5 // pred_check_branch
      %473 = sbr.rel (%p470) target = $region12
    $region11: #{up_forward.1} parent=5 // pred_region
      %s474 = ssub.s32 %s25, 1
      // Predicated region
      $region13: #{up_forward.1} parent=11 // pred_check
        %p475 = pneg %p98
      $region14: #{up_forward.1} parent=11 // pred_check_branch
        %477 = sbr.rel (%p475) target = $region16
      $region15: #{up_forward.1} parent=11 // pred_region
        _
      $region16: #{up_forward.1} parent=11 // pred_fallthru
        _
      // Predicated region
      $region17: #{up_forward.1} parent=11 // pred_check
        %p478 = pneg %p119
      $region18: #{up_forward.1} parent=11 // pred_check_branch
        %480 = sbr.rel (%p478) target = $region20
      $region19: #{up_forward.1} parent=11 // pred_region
        _
      $region20: #{up_forward.1} parent=11 // pred_fallthru
        _
      // Predicated region
      $region21: #{up_forward.1} parent=11 // pred_check
        %p481 = pneg %p140
      $region22: #{up_forward.1} parent=11 // pred_check_branch
        %483 = sbr.rel (%p481) target = $region24
      $region23: #{up_forward.1} parent=11 // pred_region
        _
      $region24: #{up_forward.1} parent=11 // pred_fallthru
        _
      // Predicated region
      $region25: #{up_forward.1} parent=11 // pred_check
        %p484 = pneg %p161
      $region26: #{up_forward.1} parent=11 // pred_check_branch
        %486 = sbr.rel (%p484) target = $region28
      $region27: #{up_forward.1} parent=11 // pred_region
        _
      $region28: #{up_forward.1} parent=11 // pred_fallthru
        _
      // Predicated region
      $region29: #{up_forward.1} parent=11 // pred_check
        %p487 = pneg %p182
      $region30: #{up_forward.1} parent=11 // pred_check_branch
        %489 = sbr.rel (%p487) target = $region32
      $region31: #{up_forward.1} parent=11 // pred_region
        _
      $region32: #{up_forward.1} parent=11 // pred_fallthru
        _
      // Predicated region
      $region33: #{up_forward.1} parent=11 // pred_check
        %p490 = pneg %p203
      $region34: #{up_forward.1} parent=11 // pred_check_branch
        %492 = sbr.rel (%p490) target = $region36
      $region35: #{up_forward.1} parent=11 // pred_region
        _
      $region36: #{up_forward.1} parent=11 // pred_fallthru
        _
      // Predicated region
      $region37: #{up_forward.1} parent=11 // pred_check
        %p493 = pneg %p224
      $region38: #{up_forward.1} parent=11 // pred_check_branch
        %495 = sbr.rel (%p493) target = $region40
      $region39: #{up_forward.1} parent=11 // pred_region
        _
      $region40: #{up_forward.1} parent=11 // pred_fallthru
        _
      // Predicated region
      $region41: #{up_forward.1} parent=11 // pred_check
        %p496 = pneg %p245
      $region42: #{up_forward.1} parent=11 // pred_check_branch
        %498 = sbr.rel (%p496) target = $region44
      $region43: #{up_forward.1} parent=11 // pred_region
        _
      $region44: #{up_forward.1} parent=11 // pred_fallthru
        _
      // Predicated region
      $region45: #{up_forward.1} parent=11 // pred_check
        %p499 = pneg %p266
      $region46: #{up_forward.1} parent=11 // pred_check_branch
        %501 = sbr.rel (%p499) target = $region48
      $region47: #{up_forward.1} parent=11 // pred_region
        _
      $region48: #{up_forward.1} parent=11 // pred_fallthru
        _
      // Predicated region
      $region49: #{up_forward.1} parent=11 // pred_check
        %p502 = pneg %p287
      $region50: #{up_forward.1} parent=11 // pred_check_branch
        %504 = sbr.rel (%p502) target = $region52
      $region51: #{up_forward.1} parent=11 // pred_region
        _
      $region52: #{up_forward.1} parent=11 // pred_fallthru
        _
      // Predicated region
      $region53: #{up_forward.1} parent=11 // pred_check
        %p505 = pneg %p308
      $region54: #{up_forward.1} parent=11 // pred_check_branch
        %507 = sbr.rel (%p505) target = $region56
      $region55: #{up_forward.1} parent=11 // pred_region
        _
      $region56: #{up_forward.1} parent=11 // pred_fallthru
        _
      // Predicated region
      $region57: #{up_forward.1} parent=11 // pred_check
        %p508 = pneg %p329
      $region58: #{up_forward.1} parent=11 // pred_check_branch
        %510 = sbr.rel (%p508) target = $region60
      $region59: #{up_forward.1} parent=11 // pred_region
        _
      $region60: #{up_forward.1} parent=11 // pred_fallthru
        _
      // Predicated region
      $region61: #{up_forward.1} parent=11 // pred_check
        %p511 = pneg %p350
      $region62: #{up_forward.1} parent=11 // pred_check_branch
        %513 = sbr.rel (%p511) target = $region64
      $region63: #{up_forward.1} parent=11 // pred_region
        _
      $region64: #{up_forward.1} parent=11 // pred_fallthru
        _
      // Predicated region
      $region65: #{up_forward.1} parent=11 // pred_check
        %p514 = pneg %p371
      $region66: #{up_forward.1} parent=11 // pred_check_branch
        %516 = sbr.rel (%p514) target = $region68
      $region67: #{up_forward.1} parent=11 // pred_region
        _
      $region68: #{up_forward.1} parent=11 // pred_fallthru
        _
      // Predicated region
      $region69: #{up_forward.1} parent=11 // pred_check
        %p517 = pneg %p392
      $region70: #{up_forward.1} parent=11 // pred_check_branch
        %519 = sbr.rel (%p517) target = $region72
      $region71: #{up_forward.1} parent=11 // pred_region
        _
      $region72: #{up_forward.1} parent=11 // pred_fallthru
        _
      // Predicated region
      $region73: #{up_forward.1} parent=11 // pred_check
        %p520 = pneg %p413
      $region74: #{up_forward.1} parent=11 // pred_check_branch
        %522 = sbr.rel (%p520) target = $region76
      $region75: #{up_forward.1} parent=11 // pred_region
        _
      $region76: #{up_forward.1} parent=11 // pred_fallthru
        _
      // Predicated region
      $region77: #{up_forward.1} parent=11 // pred_check
        %p523 = pneg %p434
      $region78: #{up_forward.1} parent=11 // pred_check_branch
        %525 = sbr.rel (%p523) target = $region80
      $region79: #{up_forward.1} parent=11 // pred_region
        _
      $region80: #{up_forward.1} parent=11 // pred_fallthru
        _
    $region12: #{up_forward.1} parent=5 // pred_fallthru
      _
    %p526 = scmp.lt.s32.totalorder %s25, 2
    // Predicated region
    $region81: #{up_forward.1} parent=5 // pred_check
      %p527 = pneg %p526
    $region82: #{up_forward.1} parent=5 // pred_check_branch
      %529 = sbr.rel (%p527) target = $region84
    $region83: #{up_forward.1} parent=5 // pred_region
      // Predicated region
      $region85: #{up_forward.1} parent=83 // pred_check
        %p530 = pneg %p45
      $region86: #{up_forward.1} parent=83 // pred_check_branch
        %532 = sbr.rel (%p530) target = $region88
      $region87: #{up_forward.1} parent=83 // pred_region
        %p533 = scmp.lt.s32.totalorder %s25, 1
        %s534 = scalar_select %p533, %s25, 1
        %s535 = smul.addr %s534, 4
        %s536 = scalar_lea.vmem %s0, %s535
      $region88: #{up_forward.1} parent=83 // pred_fallthru
        _
      // Predicated region
      $region89: #{up_forward.1} parent=83 // pred_check
        %p537 = pneg %p71
      $region90: #{up_forward.1} parent=83 // pred_check_branch
        %539 = sbr.rel (%p537) target = $region92
      $region91: #{up_forward.1} parent=83 // pred_region
        %p540 = scmp.lt.s32.totalorder %s25, 1
        %s541 = scalar_select %p540, %s25, 1
        %s542 = smul.addr %s541, 2
        %s543 = smul.addr %s542, 4
        %s544 = scalar_lea.vmem %s1, %s543
      $region92: #{up_forward.1} parent=83 // pred_fallthru
        _
    $region84: #{up_forward.1} parent=5 // pred_fallthru
      _
    %p545 = scmp.le.s32.totalorder 1, %s25
    %p546 = scmp.lt.s32.totalorder %s25, 3
    %p547 = pnand %p545, %p546
    %p548 = pneg %p547
    // Predicated region
    $region93: #{up_forward.1} parent=5 // pred_check
      _
    $region94: #{up_forward.1} parent=5 // pred_check_branch
      %550 = sbr.rel (%p547) target = $region96
    $region95: #{up_forward.1} parent=5 // pred_region
      %s551 = ssub.s32 %s25, 1
      %p552 = scmp.lt.s32.totalorder %s30, 1
      %s553 = scalar_select %p552, %s30, 1
      %s554 = smul.addr %s553, 4
      %s555 = scalar_lea.vmem %s0, %s554
      %p556 = pneg %p51
      %p557 = pneg %p48
      %p558 = scmp.lt.s32.totalorder %s30, 1
      %s559 = scalar_select %p558, %s30, 1
      %s560 = smul.addr %s559, 2
      %s561 = smul.addr %s560, 4
      %s562 = scalar_lea.vmem %s1, %s561
      %p563 = pneg %p77
      %p564 = pneg %p74
      %p565 = pneg %p98
      %p566 = pneg %p95
      %p567 = pneg %p119
      %p568 = pneg %p116
      %p569 = pneg %p140
      %p570 = pneg %p137
      %p571 = pneg %p161
      %p572 = pneg %p158
      %p573 = pneg %p182
      %p574 = pneg %p179
      %p575 = pneg %p203
      %p576 = pneg %p200
      %p577 = pneg %p224
      %p578 = pneg %p221
      %p579 = pneg %p245
      %p580 = pneg %p242
      %p581 = pneg %p266
      %p582 = pneg %p263
      %p583 = pneg %p287
      %p584 = pneg %p284
      %p585 = pneg %p308
      %p586 = pneg %p305
      %p587 = pneg %p329
      %p588 = pneg %p326
      %p589 = pneg %p350
      %p590 = pneg %p347
      %p591 = pneg %p371
      %p592 = pneg %p368
      %p593 = pneg %p392
      %p594 = pneg %p389
      %p595 = pneg %p413
      %p596 = pneg %p410
      %p597 = pneg %p434
      %p598 = pneg %p431
      %p599 = pneg %p460
      %p600 = pneg %p457
      %p601 = scmp.lt.s32.totalorder %s30, 1
      %s602 = scalar_select %p601, %s30, 1
      %s603 = smul.addr %s602, 6
      %s604 = smul.addr %s603, 8
      %s605 = scalar_lea.vmem %s19, %s604
      %p606 = scmp.lt.s32.totalorder %s30, 1
      %s607 = scalar_select %p606, %s30, 1
      %s608 = smul.addr %s607, 4
      %s609 = scalar_lea.vmem %s0, %s608
      %p610 = scmp.lt.s32.totalorder %s30, 1
      %s611 = scalar_select %p610, %s30, 1
      %s612 = smul.addr %s611, 2
      %s613 = smul.addr %s612, 4
      %s614 = scalar_lea.vmem %s1, %s613
      %p615 = scmp.lt.s32.totalorder %s30, 1
      %s616 = scalar_select %p615, %s30, 1
      %s617 = smul.addr %s616, 6
      %s618 = smul.addr %s617, 8
      %s619 = scalar_lea.vmem %s19, %s618
      %v620 = vld [vmem:[%s614] sm:$0xff]
      %622 = vst [vmem:[#allocation1] ss:$2 sm:$0xff] %v620
      %v623 = vld.sshfl [vmem:[#allocation1] sm:$0xff pattern:$0x75316420]
      %v624 = vld.sshfl [vmem:[#allocation1 + $0x8] sm:$0xff pattern:$0x75316420]
      %627 = vst [vmem:[#allocation2] sm:$0xf] %v623
      %628 = vst [vmem:[#allocation2 + $0x8] sm:$0xf] %v624
      %v629 = vld [vmem:[%s609] sm:$0xf]
      %v630 = vld [vmem:[%s2] sm:$0xff]
      %v631 = vld [vmem:[%s2 + $0x8] sm:$0xff]
      %v632 = vld [vmem:[%s2 + $0x10] sm:$0xff]
      %v633 = vld [vmem:[%s2 + $0x18] sm:$0xff]
      %v634 = vld [vmem:[%s2 + $0x20] sm:$0xff]
      %v635 = vld [vmem:[%s2 + $0x28] sm:$0xff]
      %v636 = vld [vmem:[%s2 + $0x30] sm:$0xff]
      %v637 = vld [vmem:[%s2 + $0x38] sm:$0xff]
      %v638 = vld [vmem:[%s2 + $0x40] sm:$0xff]
      %v639 = vld [vmem:[%s2 + $0x48] sm:$0xff]
      %v640 = vld [vmem:[%s2 + $0x50] sm:$0xff]
      %v641 = vld [vmem:[%s2 + $0x58] sm:$0xff]
      %v642 = vld [vmem:[%s2 + $0x60] sm:$0xff]
      %v643 = vld [vmem:[%s2 + $0x68] sm:$0xff]
      %v644 = vld [vmem:[%s2 + $0x70] sm:$0xff]
      %v645 = vld [vmem:[%s2 + $0x78] sm:$0xff]
      %vm646 = vcmask 523264
      %v648 = vsel %vm646, %v629, 0
      %650 = vmatpush.msra.mxu0 0.0
      %651 = vmatpush.msra.mxu0 0.0
      %652 = vmatpush.msra.mxu0 0.0
      %653 = vmatpush.msra.mxu0 0.0
      %654 = vmatpush.msra.mxu0 0.0
      %655 = vmatpush.msra.mxu0 0.0
      %656 = vmatpush.msra.mxu0 0.0
      %657 = vmatpush.msra.mxu0 0.0
      %658 = vmatpush.msra.mxu0 %v644
      %659 = vmatpush.msra.mxu0 %v642
      %660 = vmatpush.msra.mxu0 %v640
      %661 = vmatpush.msra.mxu0 %v638
      %662 = vmatpush.msra.mxu0 %v636
      %663 = vmatpush.msra.mxu0 %v634
      %664 = vmatpush.msra.mxu0 %v632
      %665 = vmatpush.msra.mxu0 %v630
      %666 = vmatmul.f32.gmra.mxu0 %v648
      %v667 = vpop.f32.mrf.mxu0
      %v668 = vadd.f32 0.0, %v667
      %669 = vdwg.mxu0
      %670 = vmatpush.msra.mxu0 0.0
      %671 = vmatpush.msra.mxu0 0.0
      %672 = vmatpush.msra.mxu0 0.0
      %673 = vmatpush.msra.mxu0 0.0
      %674 = vmatpush.msra.mxu0 0.0
      %675 = vmatpush.msra.mxu0 0.0
      %676 = vmatpush.msra.mxu0 0.0
      %677 = vmatpush.msra.mxu0 0.0
      %678 = vmatpush.msra.mxu0 %v645
      %679 = vmatpush.msra.mxu0 %v643
      %680 = vmatpush.msra.mxu0 %v641
      %681 = vmatpush.msra.mxu0 %v639
      %682 = vmatpush.msra.mxu0 %v637
      %683 = vmatpush.msra.mxu0 %v635
      %684 = vmatpush.msra.mxu0 %v633
      %685 = vmatpush.msra.mxu0 %v631
      %686 = vmatmul.f32.gmra.mxu0 %v648
      %v687 = vpop.f32.mrf.mxu0
      %v688 = vadd.f32 0.0, %v687
      %689 = vdwg.mxu0
      %v692 = vrot.slane %v668, 4
      %v693 = vrot.slane %v688, 4
      %696 = vst [vmem:[#allocation2] sm:$0xf0] %v692
      %697 = vst [vmem:[#allocation2 + $0x8] sm:$0xf0] %v693
      %v698 = vld [vmem:[#allocation2] sm:$0xff]
      %v699 = vld [vmem:[#allocation2 + $0x8] sm:$0xff]
      %v700 = vld [vmem:[%s5] sm:$0xf]
      %v701 = vld [vmem:[%s6] sm:$0xf]
      %703 = vset.pattern.permute.xlu0 0
      %704 = vperm.xlu0 %703, %v701
      %v705 = vpop.permute.xlu0 %704
      %vm707 = vcmask 64512
      %v709 = vsel %vm707, %v700, 0
      %711 = vmatpush.msra.mxu0 0.0
      %712 = vmatpush.msra.mxu0 0.0
      %713 = vmatpush.msra.mxu0 0.0
      %714 = vmatpush.msra.mxu0 0.0
      %715 = vmatpush.msra.mxu0 0.0
      %716 = vmatpush.msra.mxu0 0.0
      %717 = vmatpush.msra.mxu0 0.0
      %718 = vmatpush.msra.mxu0 0.0
      %719 = vmatpush.msra.mxu0 0.0
      %720 = vmatpush.msra.mxu0 0.0
      %721 = vmatpush.msra.mxu0 0.0
      %722 = vmatpush.msra.mxu0 0.0
      %723 = vmatpush.msra.mxu0 0.0
      %724 = vmatpush.msra.mxu0 0.0
      %725 = vmatpush.msra.mxu0 0.0
      %726 = vmatpush.msra.mxu0 %v698
      %727 = vmatmul.f32.gmra.mxu0 %v709
      %v728 = vpop.f32.mrf.mxu0
      %v729 = vadd.f32 %v705, %v728
      %730 = vdwg.mxu0
      %731 = vmatpush.msra.mxu0 0.0
      %732 = vmatpush.msra.mxu0 0.0
      %733 = vmatpush.msra.mxu0 0.0
      %734 = vmatpush.msra.mxu0 0.0
      %735 = vmatpush.msra.mxu0 0.0
      %736 = vmatpush.msra.mxu0 0.0
      %737 = vmatpush.msra.mxu0 0.0
      %738 = vmatpush.msra.mxu0 0.0
      %739 = vmatpush.msra.mxu0 0.0
      %740 = vmatpush.msra.mxu0 0.0
      %741 = vmatpush.msra.mxu0 0.0
      %742 = vmatpush.msra.mxu0 0.0
      %743 = vmatpush.msra.mxu0 0.0
      %744 = vmatpush.msra.mxu0 0.0
      %745 = vmatpush.msra.mxu0 0.0
      %746 = vmatpush.msra.mxu0 %v699
      %747 = vmatmul.f32.gmra.mxu0 %v709
      %v748 = vpop.f32.mrf.mxu0
      %v749 = vadd.f32 %v705, %v748
      %750 = vdwg.mxu0
      %v751 = vmax.f32 %v729, 0.0
      %v752 = vmax.f32 %v749, 0.0
      %v753 = vld [vmem:[%s7] sm:$0xf]
      %v754 = vld [vmem:[%s8] sm:$0xf]
      %756 = vset.pattern.permute.xlu0 0
      %757 = vperm.xlu0 %756, %v754
      %v758 = vpop.permute.xlu0 %757
      %v761 = vsel %vm707, %v753, 0
      %763 = vmatpush.msra.mxu0 0.0
      %764 = vmatpush.msra.mxu0 0.0
      %765 = vmatpush.msra.mxu0 0.0
      %766 = vmatpush.msra.mxu0 0.0
      %767 = vmatpush.msra.mxu0 0.0
      %768 = vmatpush.msra.mxu0 0.0
      %769 = vmatpush.msra.mxu0 0.0
      %770 = vmatpush.msra.mxu0 0.0
      %771 = vmatpush.msra.mxu0 0.0
      %772 = vmatpush.msra.mxu0 0.0
      %773 = vmatpush.msra.mxu0 0.0
      %774 = vmatpush.msra.mxu0 0.0
      %775 = vmatpush.msra.mxu0 0.0
      %776 = vmatpush.msra.mxu0 0.0
      %777 = vmatpush.msra.mxu0 0.0
      %778 = vmatpush.msra.mxu0 %v698
      %779 = vmatmul.f32.gmra.mxu0 %v761
      %v780 = vpop.f32.mrf.mxu0
      %v781 = vadd.f32 %v758, %v780
      %782 = vdwg.mxu0
      %783 = vmatpush.msra.mxu0 0.0
      %784 = vmatpush.msra.mxu0 0.0
      %785 = vmatpush.msra.mxu0 0.0
      %786 = vmatpush.msra.mxu0 0.0
      %787 = vmatpush.msra.mxu0 0.0
      %788 = vmatpush.msra.mxu0 0.0
      %789 = vmatpush.msra.mxu0 0.0
      %790 = vmatpush.msra.mxu0 0.0
      %791 = vmatpush.msra.mxu0 0.0
      %792 = vmatpush.msra.mxu0 0.0
      %793 = vmatpush.msra.mxu0 0.0
      %794 = vmatpush.msra.mxu0 0.0
      %795 = vmatpush.msra.mxu0 0.0
      %796 = vmatpush.msra.mxu0 0.0
      %797 = vmatpush.msra.mxu0 0.0
      %798 = vmatpush.msra.mxu0 %v699
      %799 = vmatmul.f32.gmra.mxu0 %v761
      %v800 = vpop.f32.mrf.mxu0
      %v801 = vadd.f32 %v758, %v800
      %802 = vdwg.mxu0
      %v803 = vmax.f32 %v781, 0.0
      %v804 = vmax.f32 %v801, 0.0
      %v805 = vld [vmem:[%s9] sm:$0xff]
      %v806 = vld [vmem:[%s9 + $0x8] sm:$0xff]
      %v807 = vld [vmem:[%s9 + $0x10] sm:$0xff]
      %v808 = vld [vmem:[%s9 + $0x18] sm:$0xff]
      %v809 = vld [vmem:[%s9 + $0x20] sm:$0xff]
      %v810 = vld [vmem:[%s9 + $0x28] sm:$0xff]
      %v811 = vld [vmem:[%s9 + $0x30] sm:$0xff]
      %v812 = vld [vmem:[%s9 + $0x38] sm:$0xff]
      %v813 = vld [vmem:[%s9 + $0x40] sm:$0xff]
      %vm814 = vcmask 31744
      %v816 = vsel %vm814, %v805, 0
      %v819 = vsel %vm814, %v806, 0
      %v822 = vsel %vm814, %v807, 0
      %v825 = vsel %vm814, %v808, 0
      %v828 = vsel %vm814, %v809, 0
      %v831 = vsel %vm814, %v810, 0
      %v834 = vsel %vm814, %v811, 0
      %v837 = vsel %vm814, %v812, 0
      %v840 = vsel %vm814, %v813, 0
      %vm842 = vcmask 1043456
      %v844 = vsel %vm842, %v803, 0
      %v847 = vsel %vm842, %v804, 0
      %849 = vmatpush.msra.mxu0 0.0
      %850 = vmatpush.msra.mxu0 0.0
      %851 = vmatpush.msra.mxu0 0.0
      %852 = vmatpush.msra.mxu0 0.0
      %853 = vmatpush.msra.mxu0 0.0
      %854 = vmatpush.msra.mxu0 0.0
      %855 = vmatpush.msra.mxu0 0.0
      %856 = vmatpush.msra.mxu0 0.0
      %857 = vmatpush.msra.mxu0 0.0
      %858 = vmatpush.msra.mxu0 0.0
      %859 = vmatpush.msra.mxu0 0.0
      %860 = vmatpush.msra.mxu0 0.0
      %861 = vmatpush.msra.mxu0 0.0
      %862 = vmatpush.msra.mxu0 0.0
      %863 = vmatpush.msra.mxu0 0.0
      %864 = vmatpush.msra.mxu0 %v844
      %865 = vmatmul.f32.gmra.mxu0 %v816
      %v866 = vpop.f32.mrf.mxu0
      %v867 = vadd.f32 0.0, %v866
      %868 = vmatmul.f32.gmra.mxu0 %v819
      %v869 = vpop.f32.mrf.mxu0
      %v870 = vadd.f32 0.0, %v869
      %871 = vmatmul.f32.gmra.mxu0 %v822
      %v872 = vpop.f32.mrf.mxu0
      %v873 = vadd.f32 0.0, %v872
      %874 = vmatmul.f32.gmra.mxu0 %v825
      %v875 = vpop.f32.mrf.mxu0
      %v876 = vadd.f32 0.0, %v875
      %877 = vmatmul.f32.gmra.mxu0 %v828
      %v878 = vpop.f32.mrf.mxu0
      %v879 = vadd.f32 0.0, %v878
      %880 = vmatmul.f32.gmra.mxu0 %v831
      %v881 = vpop.f32.mrf.mxu0
      %v882 = vadd.f32 0.0, %v881
      %883 = vmatmul.f32.gmra.mxu0 %v834
      %v884 = vpop.f32.mrf.mxu0
      %v885 = vadd.f32 0.0, %v884
      %886 = vmatmul.f32.gmra.mxu0 %v837
      %v887 = vpop.f32.mrf.mxu0
      %v888 = vadd.f32 0.0, %v887
      %889 = vmatmul.f32.gmra.mxu0 %v840
      %v890 = vpop.f32.mrf.mxu0
      %v891 = vadd.f32 0.0, %v890
      %892 = vdwg.mxu0
      %893 = vmatpush.msra.mxu0 0.0
      %894 = vmatpush.msra.mxu0 0.0
      %895 = vmatpush.msra.mxu0 0.0
      %896 = vmatpush.msra.mxu0 0.0
      %897 = vmatpush.msra.mxu0 0.0
      %898 = vmatpush.msra.mxu0 0.0
      %899 = vmatpush.msra.mxu0 0.0
      %900 = vmatpush.msra.mxu0 0.0
      %901 = vmatpush.msra.mxu0 0.0
      %902 = vmatpush.msra.mxu0 0.0
      %903 = vmatpush.msra.mxu0 0.0
      %904 = vmatpush.msra.mxu0 0.0
      %905 = vmatpush.msra.mxu0 0.0
      %906 = vmatpush.msra.mxu0 0.0
      %907 = vmatpush.msra.mxu0 0.0
      %908 = vmatpush.msra.mxu0 %v847
      %909 = vmatmul.f32.gmra.mxu0 %v816
      %v910 = vpop.f32.mrf.mxu0
      %v911 = vadd.f32 0.0, %v910
      %912 = vmatmul.f32.gmra.mxu0 %v819
      %v913 = vpop.f32.mrf.mxu0
      %v914 = vadd.f32 0.0, %v913
      %915 = vmatmul.f32.gmra.mxu0 %v822
      %v916 = vpop.f32.mrf.mxu0
      %v917 = vadd.f32 0.0, %v916
      %918 = vmatmul.f32.gmra.mxu0 %v825
      %v919 = vpop.f32.mrf.mxu0
      %v920 = vadd.f32 0.0, %v919
      %921 = vmatmul.f32.gmra.mxu0 %v828
      %v922 = vpop.f32.mrf.mxu0
      %v923 = vadd.f32 0.0, %v922
      %924 = vmatmul.f32.gmra.mxu0 %v831
      %v925 = vpop.f32.mrf.mxu0
      %v926 = vadd.f32 0.0, %v925
      %927 = vmatmul.f32.gmra.mxu0 %v834
      %v928 = vpop.f32.mrf.mxu0
      %v929 = vadd.f32 0.0, %v928
      %930 = vmatmul.f32.gmra.mxu0 %v837
      %v931 = vpop.f32.mrf.mxu0
      %v932 = vadd.f32 0.0, %v931
      %933 = vmatmul.f32.gmra.mxu0 %v840
      %v934 = vpop.f32.mrf.mxu0
      %v935 = vadd.f32 0.0, %v934
      %936 = vdwg.mxu0
      %937 = vrot.lane.b32.xlu0 %v867, 17
      %v938 = vpop.permute.xlu0 %937
      %939 = vrot.lane.b32.xlu0 %v911, 17
      %v940 = vpop.permute.xlu0 %939
      %v941 = vlaneseq
      %v942 = vand.u32 %v941, 127
      %vm943 = vcmp.lt.s32.totalorder %v942, 17
      %v944 = vsel %vm943, %v938, %v940
      %v945 = vsel %vm943, %v940, %v938
      %v946 = vld [vmem:[%s3] sm:$0x3]
      %v948 = vperm.slane %v946, 0
      %v949 = vperm.slane %v946, 1
      %v952 = vmul.f32 %v945, %v948
      %v953 = vmul.f32 %v944, %v949
      %v954 = vadd.f32 %v879, %v952
      %v955 = vadd.f32 %v923, %v953
      %956 = vrot.lane.b32.xlu0 %v870, 16
      %v957 = vpop.permute.xlu0 %956
      %958 = vrot.lane.b32.xlu0 %v914, 16
      %v959 = vpop.permute.xlu0 %958
      %vm960 = vcmp.lt.s32.totalorder %v942, 16
      %v961 = vsel %vm960, %v957, %v959
      %v962 = vsel %vm960, %v959, %v957
      %s963 = scalar_lea.vmem %s3, 2
      %v964 = vld [vmem:[%s963] sm:$0x3]
      %v966 = vperm.slane %v964, 0
      %v967 = vperm.slane %v964, 1
      %v970 = vmul.f32 %v962, %v966
      %v971 = vmul.f32 %v961, %v967
      %v972 = vadd.f32 %v954, %v970
      %v973 = vadd.f32 %v955, %v971
      %974 = vrot.lane.b32.xlu0 %v873, 15
      %v975 = vpop.permute.xlu0 %974
      %976 = vrot.lane.b32.xlu0 %v917, 15
      %v977 = vpop.permute.xlu0 %976
      %vm978 = vcmp.lt.s32.totalorder %v942, 15
      %v979 = vsel %vm978, %v975, %v977
      %v980 = vsel %vm978, %v977, %v975
      %s981 = scalar_lea.vmem %s3, 4
      %v982 = vld [vmem:[%s981] sm:$0x3]
      %v984 = vperm.slane %v982, 0
      %v985 = vperm.slane %v982, 1
      %v988 = vmul.f32 %v980, %v984
      %v989 = vmul.f32 %v979, %v985
      %v990 = vadd.f32 %v972, %v988
      %v991 = vadd.f32 %v973, %v989
      %992 = vrot.lane.b32.xlu0 %v876, 1
      %v993 = vpop.permute.xlu0 %992
      %994 = vrot.lane.b32.xlu0 %v920, 1
      %v995 = vpop.permute.xlu0 %994
      %vm996 = vcmp.lt.s32.totalorder %v942, 1
      %v997 = vsel %vm996, %v993, %v995
      %v998 = vsel %vm996, %v995, %v993
      %s999 = scalar_lea.vmem %s3, 6
      %v1000 = vld [vmem:[%s999] sm:$0x3]
      %v1002 = vperm.slane %v1000, 0
      %v1003 = vperm.slane %v1000, 1
      %v1006 = vmul.f32 %v998, %v1002
      %v1007 = vmul.f32 %v997, %v1003
      %v1008 = vadd.f32 %v990, %v1006
      %v1009 = vadd.f32 %v991, %v1007
      %1010 = vrot.lane.b32.xlu0 %v882, 127
      %v1011 = vpop.permute.xlu0 %1010
      %1012 = vrot.lane.b32.xlu0 %v926, 127
      %v1013 = vpop.permute.xlu0 %1012
      %vm1014 = vcmp.lt.s32.totalorder %v942, 127
      %v1015 = vsel %vm1014, %v1011, %v1013
      %v1016 = vsel %vm1014, %v1013, %v1011
      %s1017 = scalar_lea.vmem %s3, 10
      %v1018 = vld [vmem:[%s1017] sm:$0x3]
      %v1020 = vperm.slane %v1018, 0
      %v1021 = vperm.slane %v1018, 1
      %v1024 = vmul.f32 %v1015, %v1020
      %v1025 = vmul.f32 %v1016, %v1021
      %v1026 = vadd.f32 %v1008, %v1024
      %v1027 = vadd.f32 %v1009, %v1025
      %1028 = vrot.lane.b32.xlu0 %v885, 113
      %v1029 = vpop.permute.xlu0 %1028
      %1030 = vrot.lane.b32.xlu0 %v929, 113
      %v1031 = vpop.permute.xlu0 %1030
      %vm1032 = vcmp.lt.s32.totalorder %v942, 113
      %v1033 = vsel %vm1032, %v1029, %v1031
      %v1034 = vsel %vm1032, %v1031, %v1029
      %s1035 = scalar_lea.vmem %s3, 12
      %v1036 = vld [vmem:[%s1035] sm:$0x3]
      %v1038 = vperm.slane %v1036, 0
      %v1039 = vperm.slane %v1036, 1
      %v1042 = vmul.f32 %v1033, %v1038
      %v1043 = vmul.f32 %v1034, %v1039
      %v1044 = vadd.f32 %v1026, %v1042
      %v1045 = vadd.f32 %v1027, %v1043
      %1046 = vrot.lane.b32.xlu0 %v888, 112
      %v1047 = vpop.permute.xlu0 %1046
      %1048 = vrot.lane.b32.xlu0 %v932, 112
      %v1049 = vpop.permute.xlu0 %1048
      %vm1050 = vcmp.lt.s32.totalorder %v942, 112
      %v1051 = vsel %vm1050, %v1047, %v1049
      %v1052 = vsel %vm1050, %v1049, %v1047
      %s1053 = scalar_lea.vmem %s3, 14
      %v1054 = vld [vmem:[%s1053] sm:$0x3]
      %v1056 = vperm.slane %v1054, 0
      %v1057 = vperm.slane %v1054, 1
      %v1060 = vmul.f32 %v1051, %v1056
      %v1061 = vmul.f32 %v1052, %v1057
      %v1062 = vadd.f32 %v1044, %v1060
      %v1063 = vadd.f32 %v1045, %v1061
      %1064 = vrot.lane.b32.xlu0 %v891, 111
      %v1065 = vpop.permute.xlu0 %1064
      %1066 = vrot.lane.b32.xlu0 %v935, 111
      %v1067 = vpop.permute.xlu0 %1066
      %vm1068 = vcmp.lt.s32.totalorder %v942, 111
      %v1069 = vsel %vm1068, %v1065, %v1067
      %v1070 = vsel %vm1068, %v1067, %v1065
      %s1071 = scalar_lea.vmem %s3, 16
      %v1072 = vld [vmem:[%s1071] sm:$0x3]
      %v1074 = vperm.slane %v1072, 0
      %v1075 = vperm.slane %v1072, 1
      %v1078 = vmul.f32 %v1069, %v1074
      %v1079 = vmul.f32 %v1070, %v1075
      %v1080 = vadd.f32 %v1062, %v1078
      %v1081 = vadd.f32 %v1063, %v1079
      %v1082 = vld [vmem:[%s10] sm:$0xff]
      %1084 = vset.pattern.permute.xlu0 0
      %1085 = vperm.xlu0 %1084, %v1082
      %v1086 = vpop.permute.xlu0 %1085
      %v1088 = vadd.f32 %v1080, %v1086
      %v1089 = vadd.f32 %v1081, %v1086
      %v1090 = vmax.f32 %v1088, 0.0
      %v1091 = vmax.f32 %v1089, 0.0
      %v1092 = vld [vmem:[%s11] sm:$0xf]
      %v1093 = vld [vmem:[%s12] sm:$0xf]
      %1095 = vset.pattern.permute.xlu0 0
      %1096 = vperm.xlu0 %1095, %v1093
      %v1097 = vpop.permute.xlu0 %1096
      %v1100 = vsel %vm707, %v1092, 0
      %1102 = vmatpush.msra.mxu0 0.0
      %1103 = vmatpush.msra.mxu0 0.0
      %1104 = vmatpush.msra.mxu0 0.0
      %1105 = vmatpush.msra.mxu0 0.0
      %1106 = vmatpush.msra.mxu0 0.0
      %1107 = vmatpush.msra.mxu0 0.0
      %1108 = vmatpush.msra.mxu0 0.0
      %1109 = vmatpush.msra.mxu0 0.0
      %1110 = vmatpush.msra.mxu0 0.0
      %1111 = vmatpush.msra.mxu0 0.0
      %1112 = vmatpush.msra.mxu0 0.0
      %1113 = vmatpush.msra.mxu0 0.0
      %1114 = vmatpush.msra.mxu0 0.0
      %1115 = vmatpush.msra.mxu0 0.0
      %1116 = vmatpush.msra.mxu0 0.0
      %1117 = vmatpush.msra.mxu0 %v698
      %1118 = vmatmul.f32.gmra.mxu0 %v1100
      %v1119 = vpop.f32.mrf.mxu0
      %v1120 = vadd.f32 %v1097, %v1119
      %1121 = vdwg.mxu0
      %1122 = vmatpush.msra.mxu0 0.0
      %1123 = vmatpush.msra.mxu0 0.0
      %1124 = vmatpush.msra.mxu0 0.0
      %1125 = vmatpush.msra.mxu0 0.0
      %1126 = vmatpush.msra.mxu0 0.0
      %1127 = vmatpush.msra.mxu0 0.0
      %1128 = vmatpush.msra.mxu0 0.0
      %1129 = vmatpush.msra.mxu0 0.0
      %1130 = vmatpush.msra.mxu0 0.0
      %1131 = vmatpush.msra.mxu0 0.0
      %1132 = vmatpush.msra.mxu0 0.0
      %1133 = vmatpush.msra.mxu0 0.0
      %1134 = vmatpush.msra.mxu0 0.0
      %1135 = vmatpush.msra.mxu0 0.0
      %1136 = vmatpush.msra.mxu0 0.0
      %1137 = vmatpush.msra.mxu0 %v699
      %1138 = vmatmul.f32.gmra.mxu0 %v1100
      %v1139 = vpop.f32.mrf.mxu0
      %v1140 = vadd.f32 %v1097, %v1139
      %1141 = vdwg.mxu0
      %v1142 = vmax.f32 %v1120, 0.0
      %v1143 = vmax.f32 %v1140, 0.0
      %v1144 = vld [vmem:[%s13] sm:$0xff]
      %v1145 = vld [vmem:[%s13 + $0x8] sm:$0xff]
      %v1146 = vld [vmem:[%s13 + $0x10] sm:$0xff]
      %v1147 = vld [vmem:[%s13 + $0x18] sm:$0xff]
      %v1148 = vld [vmem:[%s13 + $0x20] sm:$0xff]
      %v1149 = vld [vmem:[%s13 + $0x28] sm:$0xff]
      %v1150 = vld [vmem:[%s13 + $0x30] sm:$0xff]
      %v1151 = vld [vmem:[%s13 + $0x38] sm:$0xff]
      %v1152 = vld [vmem:[%s13 + $0x40] sm:$0xff]
      %v1154 = vsel %vm814, %v1144, 0
      %v1157 = vsel %vm814, %v1145, 0
      %v1160 = vsel %vm814, %v1146, 0
      %v1163 = vsel %vm814, %v1147, 0
      %v1166 = vsel %vm814, %v1148, 0
      %v1169 = vsel %vm814, %v1149, 0
      %v1172 = vsel %vm814, %v1150, 0
      %v1175 = vsel %vm814, %v1151, 0
      %v1178 = vsel %vm814, %v1152, 0
      %v1181 = vsel %vm842, %v1142, 0
      %v1184 = vsel %vm842, %v1143, 0
      %1186 = vmatpush.msra.mxu0 0.0
      %1187 = vmatpush.msra.mxu0 0.0
      %1188 = vmatpush.msra.mxu0 0.0
      %1189 = vmatpush.msra.mxu0 0.0
      %1190 = vmatpush.msra.mxu0 0.0
      %1191 = vmatpush.msra.mxu0 0.0
      %1192 = vmatpush.msra.mxu0 0.0
      %1193 = vmatpush.msra.mxu0 0.0
      %1194 = vmatpush.msra.mxu0 0.0
      %1195 = vmatpush.msra.mxu0 0.0
      %1196 = vmatpush.msra.mxu0 0.0
      %1197 = vmatpush.msra.mxu0 0.0
      %1198 = vmatpush.msra.mxu0 0.0
      %1199 = vmatpush.msra.mxu0 0.0
      %1200 = vmatpush.msra.mxu0 0.0
      %1201 = vmatpush.msra.mxu0 %v1181
      %1202 = vmatmul.f32.gmra.mxu0 %v1154
      %v1203 = vpop.f32.mrf.mxu0
      %v1204 = vadd.f32 0.0, %v1203
      %1205 = vmatmul.f32.gmra.mxu0 %v1157
      %v1206 = vpop.f32.mrf.mxu0
      %v1207 = vadd.f32 0.0, %v1206
      %1208 = vmatmul.f32.gmra.mxu0 %v1160
      %v1209 = vpop.f32.mrf.mxu0
      %v1210 = vadd.f32 0.0, %v1209
      %1211 = vmatmul.f32.gmra.mxu0 %v1163
      %v1212 = vpop.f32.mrf.mxu0
      %v1213 = vadd.f32 0.0, %v1212
      %1214 = vmatmul.f32.gmra.mxu0 %v1166
      %v1215 = vpop.f32.mrf.mxu0
      %v1216 = vadd.f32 0.0, %v1215
      %1217 = vmatmul.f32.gmra.mxu0 %v1169
      %v1218 = vpop.f32.mrf.mxu0
      %v1219 = vadd.f32 0.0, %v1218
      %1220 = vmatmul.f32.gmra.mxu0 %v1172
      %v1221 = vpop.f32.mrf.mxu0
      %v1222 = vadd.f32 0.0, %v1221
      %1223 = vmatmul.f32.gmra.mxu0 %v1175
      %v1224 = vpop.f32.mrf.mxu0
      %v1225 = vadd.f32 0.0, %v1224
      %1226 = vmatmul.f32.gmra.mxu0 %v1178
      %v1227 = vpop.f32.mrf.mxu0
      %v1228 = vadd.f32 0.0, %v1227
      %1229 = vdwg.mxu0
      %1230 = vmatpush.msra.mxu0 0.0
      %1231 = vmatpush.msra.mxu0 0.0
      %1232 = vmatpush.msra.mxu0 0.0
      %1233 = vmatpush.msra.mxu0 0.0
      %1234 = vmatpush.msra.mxu0 0.0
      %1235 = vmatpush.msra.mxu0 0.0
      %1236 = vmatpush.msra.mxu0 0.0
      %1237 = vmatpush.msra.mxu0 0.0
      %1238 = vmatpush.msra.mxu0 0.0
      %1239 = vmatpush.msra.mxu0 0.0
      %1240 = vmatpush.msra.mxu0 0.0
      %1241 = vmatpush.msra.mxu0 0.0
      %1242 = vmatpush.msra.mxu0 0.0
      %1243 = vmatpush.msra.mxu0 0.0
      %1244 = vmatpush.msra.mxu0 0.0
      %1245 = vmatpush.msra.mxu0 %v1184
      %1246 = vmatmul.f32.gmra.mxu0 %v1154
      %v1247 = vpop.f32.mrf.mxu0
      %v1248 = vadd.f32 0.0, %v1247
      %1249 = vmatmul.f32.gmra.mxu0 %v1157
      %v1250 = vpop.f32.mrf.mxu0
      %v1251 = vadd.f32 0.0, %v1250
      %1252 = vmatmul.f32.gmra.mxu0 %v1160
      %v1253 = vpop.f32.mrf.mxu0
      %v1254 = vadd.f32 0.0, %v1253
      %1255 = vmatmul.f32.gmra.mxu0 %v1163
      %v1256 = vpop.f32.mrf.mxu0
      %v1257 = vadd.f32 0.0, %v1256
      %1258 = vmatmul.f32.gmra.mxu0 %v1166
      %v1259 = vpop.f32.mrf.mxu0
      %v1260 = vadd.f32 0.0, %v1259
      %1261 = vmatmul.f32.gmra.mxu0 %v1169
      %v1262 = vpop.f32.mrf.mxu0
      %v1263 = vadd.f32 0.0, %v1262
      %1264 = vmatmul.f32.gmra.mxu0 %v1172
      %v1265 = vpop.f32.mrf.mxu0
      %v1266 = vadd.f32 0.0, %v1265
      %1267 = vmatmul.f32.gmra.mxu0 %v1175
      %v1268 = vpop.f32.mrf.mxu0
      %v1269 = vadd.f32 0.0, %v1268
      %1270 = vmatmul.f32.gmra.mxu0 %v1178
      %v1271 = vpop.f32.mrf.mxu0
      %v1272 = vadd.f32 0.0, %v1271
      %1273 = vdwg.mxu0
      %1274 = vrot.lane.b32.xlu0 %v1204, 17
      %v1275 = vpop.permute.xlu0 %1274
      %1276 = vrot.lane.b32.xlu0 %v1248, 17
      %v1277 = vpop.permute.xlu0 %1276
      %v1278 = vsel %vm943, %v1275, %v1277
      %v1279 = vsel %vm943, %v1277, %v1275
      %v1280 = vmul.f32 %v1279, %v948
      %v1281 = vmul.f32 %v1278, %v949
      %v1282 = vadd.f32 %v1216, %v1280
      %v1283 = vadd.f32 %v1260, %v1281
      %1284 = vrot.lane.b32.xlu0 %v1207, 16
      %v1285 = vpop.permute.xlu0 %1284
      %1286 = vrot.lane.b32.xlu0 %v1251, 16
      %v1287 = vpop.permute.xlu0 %1286
      %v1288 = vsel %vm960, %v1285, %v1287
      %v1289 = vsel %vm960, %v1287, %v1285
      %v1290 = vmul.f32 %v1289, %v966
      %v1291 = vmul.f32 %v1288, %v967
      %v1292 = vadd.f32 %v1282, %v1290
      %v1293 = vadd.f32 %v1283, %v1291
      %1294 = vrot.lane.b32.xlu0 %v1210, 15
      %v1295 = vpop.permute.xlu0 %1294
      %1296 = vrot.lane.b32.xlu0 %v1254, 15
      %v1297 = vpop.permute.xlu0 %1296
      %v1298 = vsel %vm978, %v1295, %v1297
      %v1299 = vsel %vm978, %v1297, %v1295
      %v1300 = vmul.f32 %v1299, %v984
      %v1301 = vmul.f32 %v1298, %v985
      %v1302 = vadd.f32 %v1292, %v1300
      %v1303 = vadd.f32 %v1293, %v1301
      %1304 = vrot.lane.b32.xlu0 %v1213, 1
      %v1305 = vpop.permute.xlu0 %1304
      %1306 = vrot.lane.b32.xlu0 %v1257, 1
      %v1307 = vpop.permute.xlu0 %1306
      %v1308 = vsel %vm996, %v1305, %v1307
      %v1309 = vsel %vm996, %v1307, %v1305
      %v1310 = vmul.f32 %v1309, %v1002
      %v1311 = vmul.f32 %v1308, %v1003
      %v1312 = vadd.f32 %v1302, %v1310
      %v1313 = vadd.f32 %v1303, %v1311
      %1314 = vrot.lane.b32.xlu0 %v1219, 127
      %v1315 = vpop.permute.xlu0 %1314
      %1316 = vrot.lane.b32.xlu0 %v1263, 127
      %v1317 = vpop.permute.xlu0 %1316
      %v1318 = vsel %vm1014, %v1315, %v1317
      %v1319 = vsel %vm1014, %v1317, %v1315
      %v1320 = vmul.f32 %v1318, %v1020
      %v1321 = vmul.f32 %v1319, %v1021
      %v1322 = vadd.f32 %v1312, %v1320
      %v1323 = vadd.f32 %v1313, %v1321
      %1324 = vrot.lane.b32.xlu0 %v1222, 113
      %v1325 = vpop.permute.xlu0 %1324
      %1326 = vrot.lane.b32.xlu0 %v1266, 113
      %v1327 = vpop.permute.xlu0 %1326
      %v1328 = vsel %vm1032, %v1325, %v1327
      %v1329 = vsel %vm1032, %v1327, %v1325
      %v1330 = vmul.f32 %v1328, %v1038
      %v1331 = vmul.f32 %v1329, %v1039
      %v1332 = vadd.f32 %v1322, %v1330
      %v1333 = vadd.f32 %v1323, %v1331
      %1334 = vrot.lane.b32.xlu0 %v1225, 112
      %v1335 = vpop.permute.xlu0 %1334
      %1336 = vrot.lane.b32.xlu0 %v1269, 112
      %v1337 = vpop.permute.xlu0 %1336
      %v1338 = vsel %vm1050, %v1335, %v1337
      %v1339 = vsel %vm1050, %v1337, %v1335
      %v1340 = vmul.f32 %v1338, %v1056
      %v1341 = vmul.f32 %v1339, %v1057
      %v1342 = vadd.f32 %v1332, %v1340
      %v1343 = vadd.f32 %v1333, %v1341
      %1344 = vrot.lane.b32.xlu0 %v1228, 111
      %v1345 = vpop.permute.xlu0 %1344
      %1346 = vrot.lane.b32.xlu0 %v1272, 111
      %v1347 = vpop.permute.xlu0 %1346
      %v1348 = vsel %vm1068, %v1345, %v1347
      %v1349 = vsel %vm1068, %v1347, %v1345
      %v1350 = vmul.f32 %v1348, %v1074
      %v1351 = vmul.f32 %v1349, %v1075
      %v1352 = vadd.f32 %v1342, %v1350
      %v1353 = vadd.f32 %v1343, %v1351
      %v1354 = vld [vmem:[%s14] sm:$0xff]
      %1356 = vset.pattern.permute.xlu0 0
      %1357 = vperm.xlu0 %1356, %v1354
      %v1358 = vpop.permute.xlu0 %1357
      %v1360 = vadd.f32 %v1352, %v1358
      %v1361 = vadd.f32 %v1353, %v1358
      %v1362 = vmax.f32 %v1360, 0.0
      %v1363 = vmax.f32 %v1361, 0.0
      %v1364 = vld [vmem:[%s15] sm:$0xff]
      %v1365 = vld [vmem:[%s15 + $0x8] sm:$0xff]
      %v1366 = vld [vmem:[%s15 + $0x10] sm:$0xff]
      %v1367 = vld [vmem:[%s15 + $0x18] sm:$0xff]
      %v1368 = vld [vmem:[%s15 + $0x20] sm:$0xff]
      %v1369 = vld [vmem:[%s15 + $0x28] sm:$0xff]
      %v1370 = vld [vmem:[%s15 + $0x30] sm:$0xff]
      %v1371 = vld [vmem:[%s15 + $0x38] sm:$0xff]
      %v1372 = vld [vmem:[%s15 + $0x40] sm:$0xff]
      %v1374 = vsel %vm707, %v1364, 0
      %v1377 = vsel %vm707, %v1365, 0
      %v1380 = vsel %vm707, %v1366, 0
      %v1383 = vsel %vm707, %v1367, 0
      %v1386 = vsel %vm707, %v1368, 0
      %v1389 = vsel %vm707, %v1369, 0
      %v1392 = vsel %vm707, %v1370, 0
      %v1395 = vsel %vm707, %v1371, 0
      %v1398 = vsel %vm707, %v1372, 0
      %1400 = vmatpush.msra.mxu0 0.0
      %1401 = vmatpush.msra.mxu0 0.0
      %1402 = vmatpush.msra.mxu0 0.0
      %1403 = vmatpush.msra.mxu0 0.0
      %1404 = vmatpush.msra.mxu0 0.0
      %1405 = vmatpush.msra.mxu0 0.0
      %1406 = vmatpush.msra.mxu0 0.0
      %1407 = vmatpush.msra.mxu0 0.0
      %1408 = vmatpush.msra.mxu0 0.0
      %1409 = vmatpush.msra.mxu0 0.0
      %1410 = vmatpush.msra.mxu0 0.0
      %1411 = vmatpush.msra.mxu0 0.0
      %1412 = vmatpush.msra.mxu0 0.0
      %1413 = vmatpush.msra.mxu0 0.0
      %1414 = vmatpush.msra.mxu0 0.0
      %1415 = vmatpush.msra.mxu0 %v1362
      %1416 = vmatmul.f32.gmra.mxu0 %v1374
      %v1417 = vpop.f32.mrf.mxu0
      %v1418 = vadd.f32 0.0, %v1417
      %1419 = vmatmul.f32.gmra.mxu0 %v1377
      %v1420 = vpop.f32.mrf.mxu0
      %v1421 = vadd.f32 0.0, %v1420
      %1422 = vmatmul.f32.gmra.mxu0 %v1380
      %v1423 = vpop.f32.mrf.mxu0
      %v1424 = vadd.f32 0.0, %v1423
      %1425 = vmatmul.f32.gmra.mxu0 %v1383
      %v1426 = vpop.f32.mrf.mxu0
      %v1427 = vadd.f32 0.0, %v1426
      %1428 = vmatmul.f32.gmra.mxu0 %v1386
      %v1429 = vpop.f32.mrf.mxu0
      %v1430 = vadd.f32 0.0, %v1429
      %1431 = vmatmul.f32.gmra.mxu0 %v1389
      %v1432 = vpop.f32.mrf.mxu0
      %v1433 = vadd.f32 0.0, %v1432
      %1434 = vmatmul.f32.gmra.mxu0 %v1392
      %v1435 = vpop.f32.mrf.mxu0
      %v1436 = vadd.f32 0.0, %v1435
      %1437 = vmatmul.f32.gmra.mxu0 %v1395
      %v1438 = vpop.f32.mrf.mxu0
      %v1439 = vadd.f32 0.0, %v1438
      %1440 = vmatmul.f32.gmra.mxu0 %v1398
      %v1441 = vpop.f32.mrf.mxu0
      %v1442 = vadd.f32 0.0, %v1441
      %1443 = vdwg.mxu0
      %1444 = vmatpush.msra.mxu0 0.0
      %1445 = vmatpush.msra.mxu0 0.0
      %1446 = vmatpush.msra.mxu0 0.0
      %1447 = vmatpush.msra.mxu0 0.0
      %1448 = vmatpush.msra.mxu0 0.0
      %1449 = vmatpush.msra.mxu0 0.0
      %1450 = vmatpush.msra.mxu0 0.0
      %1451 = vmatpush.msra.mxu0 0.0
      %1452 = vmatpush.msra.mxu0 0.0
      %1453 = vmatpush.msra.mxu0 0.0
      %1454 = vmatpush.msra.mxu0 0.0
      %1455 = vmatpush.msra.mxu0 0.0
      %1456 = vmatpush.msra.mxu0 0.0
      %1457 = vmatpush.msra.mxu0 0.0
      %1458 = vmatpush.msra.mxu0 0.0
      %1459 = vmatpush.msra.mxu0 %v1363
      %1460 = vmatmul.f32.gmra.mxu0 %v1374
      %v1461 = vpop.f32.mrf.mxu0
      %v1462 = vadd.f32 0.0, %v1461
      %1463 = vmatmul.f32.gmra.mxu0 %v1377
      %v1464 = vpop.f32.mrf.mxu0
      %v1465 = vadd.f32 0.0, %v1464
      %1466 = vmatmul.f32.gmra.mxu0 %v1380
      %v1467 = vpop.f32.mrf.mxu0
      %v1468 = vadd.f32 0.0, %v1467
      %1469 = vmatmul.f32.gmra.mxu0 %v1383
      %v1470 = vpop.f32.mrf.mxu0
      %v1471 = vadd.f32 0.0, %v1470
      %1472 = vmatmul.f32.gmra.mxu0 %v1386
      %v1473 = vpop.f32.mrf.mxu0
      %v1474 = vadd.f32 0.0, %v1473
      %1475 = vmatmul.f32.gmra.mxu0 %v1389
      %v1476 = vpop.f32.mrf.mxu0
      %v1477 = vadd.f32 0.0, %v1476
      %1478 = vmatmul.f32.gmra.mxu0 %v1392
      %v1479 = vpop.f32.mrf.mxu0
      %v1480 = vadd.f32 0.0, %v1479
      %1481 = vmatmul.f32.gmra.mxu0 %v1395
      %v1482 = vpop.f32.mrf.mxu0
      %v1483 = vadd.f32 0.0, %v1482
      %1484 = vmatmul.f32.gmra.mxu0 %v1398
      %v1485 = vpop.f32.mrf.mxu0
      %v1486 = vadd.f32 0.0, %v1485
      %1487 = vdwg.mxu0
      %1488 = vrot.lane.b32.xlu0 %v1418, 17
      %v1489 = vpop.permute.xlu0 %1488
      %1490 = vrot.lane.b32.xlu0 %v1462, 17
      %v1491 = vpop.permute.xlu0 %1490
      %v1492 = vsel %vm943, %v1489, %v1491
      %v1493 = vsel %vm943, %v1491, %v1489
      %v1494 = vmul.f32 %v1493, %v948
      %v1495 = vmul.f32 %v1492, %v949
      %v1496 = vadd.f32 %v1430, %v1494
      %v1497 = vadd.f32 %v1474, %v1495
      %1498 = vrot.lane.b32.xlu0 %v1421, 16
      %v1499 = vpop.permute.xlu0 %1498
      %1500 = vrot.lane.b32.xlu0 %v1465, 16
      %v1501 = vpop.permute.xlu0 %1500
      %v1502 = vsel %vm960, %v1499, %v1501
      %v1503 = vsel %vm960, %v1501, %v1499
      %v1504 = vmul.f32 %v1503, %v966
      %v1505 = vmul.f32 %v1502, %v967
      %v1506 = vadd.f32 %v1496, %v1504
      %v1507 = vadd.f32 %v1497, %v1505
      %1508 = vrot.lane.b32.xlu0 %v1424, 15
      %v1509 = vpop.permute.xlu0 %1508
      %1510 = vrot.lane.b32.xlu0 %v1468, 15
      %v1511 = vpop.permute.xlu0 %1510
      %v1512 = vsel %vm978, %v1509, %v1511
      %v1513 = vsel %vm978, %v1511, %v1509
      %v1514 = vmul.f32 %v1513, %v984
      %v1515 = vmul.f32 %v1512, %v985
      %v1516 = vadd.f32 %v1506, %v1514
      %v1517 = vadd.f32 %v1507, %v1515
      %1518 = vrot.lane.b32.xlu0 %v1427, 1
      %v1519 = vpop.permute.xlu0 %1518
      %1520 = vrot.lane.b32.xlu0 %v1471, 1
      %v1521 = vpop.permute.xlu0 %1520
      %v1522 = vsel %vm996, %v1519, %v1521
      %v1523 = vsel %vm996, %v1521, %v1519
      %v1524 = vmul.f32 %v1523, %v1002
      %v1525 = vmul.f32 %v1522, %v1003
      %v1526 = vadd.f32 %v1516, %v1524
      %v1527 = vadd.f32 %v1517, %v1525
      %1528 = vrot.lane.b32.xlu0 %v1433, 127
      %v1529 = vpop.permute.xlu0 %1528
      %1530 = vrot.lane.b32.xlu0 %v1477, 127
      %v1531 = vpop.permute.xlu0 %1530
      %v1532 = vsel %vm1014, %v1529, %v1531
      %v1533 = vsel %vm1014, %v1531, %v1529
      %v1534 = vmul.f32 %v1532, %v1020
      %v1535 = vmul.f32 %v1533, %v1021
      %v1536 = vadd.f32 %v1526, %v1534
      %v1537 = vadd.f32 %v1527, %v1535
      %1538 = vrot.lane.b32.xlu0 %v1436, 113
      %v1539 = vpop.permute.xlu0 %1538
      %1540 = vrot.lane.b32.xlu0 %v1480, 113
      %v1541 = vpop.permute.xlu0 %1540
      %v1542 = vsel %vm1032, %v1539, %v1541
      %v1543 = vsel %vm1032, %v1541, %v1539
      %v1544 = vmul.f32 %v1542, %v1038
      %v1545 = vmul.f32 %v1543, %v1039
      %v1546 = vadd.f32 %v1536, %v1544
      %v1547 = vadd.f32 %v1537, %v1545
      %1548 = vrot.lane.b32.xlu0 %v1439, 112
      %v1549 = vpop.permute.xlu0 %1548
      %1550 = vrot.lane.b32.xlu0 %v1483, 112
      %v1551 = vpop.permute.xlu0 %1550
      %v1552 = vsel %vm1050, %v1549, %v1551
      %v1553 = vsel %vm1050, %v1551, %v1549
      %v1554 = vmul.f32 %v1552, %v1056
      %v1555 = vmul.f32 %v1553, %v1057
      %v1556 = vadd.f32 %v1546, %v1554
      %v1557 = vadd.f32 %v1547, %v1555
      %1558 = vrot.lane.b32.xlu0 %v1442, 111
      %v1559 = vpop.permute.xlu0 %1558
      %1560 = vrot.lane.b32.xlu0 %v1486, 111
      %v1561 = vpop.permute.xlu0 %1560
      %v1562 = vsel %vm1068, %v1559, %v1561
      %v1563 = vsel %vm1068, %v1561, %v1559
      %v1564 = vmul.f32 %v1562, %v1074
      %v1565 = vmul.f32 %v1563, %v1075
      %v1566 = vadd.f32 %v1556, %v1564
      %v1567 = vadd.f32 %v1557, %v1565
      %v1568 = vld [vmem:[%s16] sm:$0xff]
      %1570 = vset.pattern.permute.xlu0 0
      %1571 = vperm.xlu0 %1570, %v1568
      %v1572 = vpop.permute.xlu0 %1571
      %v1574 = vadd.f32 %v1566, %v1572
      %v1575 = vadd.f32 %v1567, %v1572
      %v1576 = vmax.f32 %v1574, 0.0
      %v1577 = vmax.f32 %v1575, 0.0
      %1578 = vrot.lane.b32.xlu0 %v698, 17
      %v1579 = vpop.permute.xlu0 %1578
      %1580 = vrot.lane.b32.xlu0 %v699, 17
      %v1581 = vpop.permute.xlu0 %1580
      %v1582 = vsel %vm943, %v1579, %v1581
      %v1583 = vsel %vm943, %v1581, %v1579
      %v1584 = vld [vmem:[%s4] sm:$0x3]
      %v1586 = vperm.slane %v1584, 0
      %v1587 = vperm.slane %v1584, 1
      %v1590 = vadd.f32 %v1583, %v1586
      %v1591 = vadd.f32 %v1582, %v1587
      %v1592 = vmax.f32 %v698, %v1590
      %v1593 = vmax.f32 %v699, %v1591
      %1594 = vrot.lane.b32.xlu0 %v698, 16
      %v1595 = vpop.permute.xlu0 %1594
      %1596 = vrot.lane.b32.xlu0 %v699, 16
      %v1597 = vpop.permute.xlu0 %1596
      %v1598 = vsel %vm960, %v1595, %v1597
      %v1599 = vsel %vm960, %v1597, %v1595
      %s1600 = scalar_lea.vmem %s4, 2
      %v1601 = vld [vmem:[%s1600] sm:$0x3]
      %v1603 = vperm.slane %v1601, 0
      %v1604 = vperm.slane %v1601, 1
      %v1607 = vadd.f32 %v1599, %v1603
      %v1608 = vadd.f32 %v1598, %v1604
      %v1609 = vmax.f32 %v1592, %v1607
      %v1610 = vmax.f32 %v1593, %v1608
      %1611 = vrot.lane.b32.xlu0 %v698, 15
      %v1612 = vpop.permute.xlu0 %1611
      %1613 = vrot.lane.b32.xlu0 %v699, 15
      %v1614 = vpop.permute.xlu0 %1613
      %v1615 = vsel %vm978, %v1612, %v1614
      %v1616 = vsel %vm978, %v1614, %v1612
      %s1617 = scalar_lea.vmem %s4, 4
      %v1618 = vld [vmem:[%s1617] sm:$0x3]
      %v1620 = vperm.slane %v1618, 0
      %v1621 = vperm.slane %v1618, 1
      %v1624 = vadd.f32 %v1616, %v1620
      %v1625 = vadd.f32 %v1615, %v1621
      %v1626 = vmax.f32 %v1609, %v1624
      %v1627 = vmax.f32 %v1610, %v1625
      %1628 = vrot.lane.b32.xlu0 %v698, 1
      %v1629 = vpop.permute.xlu0 %1628
      %1630 = vrot.lane.b32.xlu0 %v699, 1
      %v1631 = vpop.permute.xlu0 %1630
      %v1632 = vsel %vm996, %v1629, %v1631
      %v1633 = vsel %vm996, %v1631, %v1629
      %s1634 = scalar_lea.vmem %s4, 6
      %v1635 = vld [vmem:[%s1634] sm:$0x3]
      %v1637 = vperm.slane %v1635, 0
      %v1638 = vperm.slane %v1635, 1
      %v1641 = vadd.f32 %v1633, %v1637
      %v1642 = vadd.f32 %v1632, %v1638
      %v1643 = vmax.f32 %v1626, %v1641
      %v1644 = vmax.f32 %v1627, %v1642
      %1645 = vrot.lane.b32.xlu0 %v698, 127
      %v1646 = vpop.permute.xlu0 %1645
      %1647 = vrot.lane.b32.xlu0 %v699, 127
      %v1648 = vpop.permute.xlu0 %1647
      %v1649 = vsel %vm1014, %v1646, %v1648
      %v1650 = vsel %vm1014, %v1648, %v1646
      %s1651 = scalar_lea.vmem %s4, 10
      %v1652 = vld [vmem:[%s1651] sm:$0x3]
      %v1654 = vperm.slane %v1652, 0
      %v1655 = vperm.slane %v1652, 1
      %v1658 = vadd.f32 %v1649, %v1654
      %v1659 = vadd.f32 %v1650, %v1655
      %v1660 = vmax.f32 %v1643, %v1658
      %v1661 = vmax.f32 %v1644, %v1659
      %1662 = vrot.lane.b32.xlu0 %v698, 113
      %v1663 = vpop.permute.xlu0 %1662
      %1664 = vrot.lane.b32.xlu0 %v699, 113
      %v1665 = vpop.permute.xlu0 %1664
      %v1666 = vsel %vm1032, %v1663, %v1665
      %v1667 = vsel %vm1032, %v1665, %v1663
      %s1668 = scalar_lea.vmem %s4, 12
      %v1669 = vld [vmem:[%s1668] sm:$0x3]
      %v1671 = vperm.slane %v1669, 0
      %v1672 = vperm.slane %v1669, 1
      %v1675 = vadd.f32 %v1666, %v1671
      %v1676 = vadd.f32 %v1667, %v1672
      %v1677 = vmax.f32 %v1660, %v1675
      %v1678 = vmax.f32 %v1661, %v1676
      %1679 = vrot.lane.b32.xlu0 %v698, 112
      %v1680 = vpop.permute.xlu0 %1679
      %1681 = vrot.lane.b32.xlu0 %v699, 112
      %v1682 = vpop.permute.xlu0 %1681
      %v1683 = vsel %vm1050, %v1680, %v1682
      %v1684 = vsel %vm1050, %v1682, %v1680
      %s1685 = scalar_lea.vmem %s4, 14
      %v1686 = vld [vmem:[%s1685] sm:$0x3]
      %v1688 = vperm.slane %v1686, 0
      %v1689 = vperm.slane %v1686, 1
      %v1692 = vadd.f32 %v1683, %v1688
      %v1693 = vadd.f32 %v1684, %v1689
      %v1694 = vmax.f32 %v1677, %v1692
      %v1695 = vmax.f32 %v1678, %v1693
      %1696 = vrot.lane.b32.xlu0 %v698, 111
      %v1697 = vpop.permute.xlu0 %1696
      %1698 = vrot.lane.b32.xlu0 %v699, 111
      %v1699 = vpop.permute.xlu0 %1698
      %v1700 = vsel %vm1068, %v1697, %v1699
      %v1701 = vsel %vm1068, %v1699, %v1697
      %s1702 = scalar_lea.vmem %s4, 16
      %v1703 = vld [vmem:[%s1702] sm:$0x3]
      %v1705 = vperm.slane %v1703, 0
      %v1706 = vperm.slane %v1703, 1
      %v1709 = vadd.f32 %v1700, %v1705
      %v1710 = vadd.f32 %v1701, %v1706
      %v1711 = vmax.f32 %v1694, %v1709
      %v1712 = vmax.f32 %v1695, %v1710
      %v1713 = vld [vmem:[%s17] sm:$0xf]
      %v1714 = vld [vmem:[%s18] sm:$0xf]
      %1716 = vset.pattern.permute.xlu0 0
      %1717 = vperm.xlu0 %1716, %v1714
      %v1718 = vpop.permute.xlu0 %1717
      %v1721 = vsel %vm707, %v1713, 0
      %1723 = vmatpush.msra.mxu0 0.0
      %1724 = vmatpush.msra.mxu0 0.0
      %1725 = vmatpush.msra.mxu0 0.0
      %1726 = vmatpush.msra.mxu0 0.0
      %1727 = vmatpush.msra.mxu0 0.0
      %1728 = vmatpush.msra.mxu0 0.0
      %1729 = vmatpush.msra.mxu0 0.0
      %1730 = vmatpush.msra.mxu0 0.0
      %1731 = vmatpush.msra.mxu0 0.0
      %1732 = vmatpush.msra.mxu0 0.0
      %1733 = vmatpush.msra.mxu0 0.0
      %1734 = vmatpush.msra.mxu0 0.0
      %1735 = vmatpush.msra.mxu0 0.0
      %1736 = vmatpush.msra.mxu0 0.0
      %1737 = vmatpush.msra.mxu0 0.0
      %1738 = vmatpush.msra.mxu0 %v1711
      %1739 = vmatmul.f32.gmra.mxu0 %v1721
      %v1740 = vpop.f32.mrf.mxu0
      %v1741 = vadd.f32 %v1718, %v1740
      %1742 = vdwg.mxu0
      %1743 = vmatpush.msra.mxu0 0.0
      %1744 = vmatpush.msra.mxu0 0.0
      %1745 = vmatpush.msra.mxu0 0.0
      %1746 = vmatpush.msra.mxu0 0.0
      %1747 = vmatpush.msra.mxu0 0.0
      %1748 = vmatpush.msra.mxu0 0.0
      %1749 = vmatpush.msra.mxu0 0.0
      %1750 = vmatpush.msra.mxu0 0.0
      %1751 = vmatpush.msra.mxu0 0.0
      %1752 = vmatpush.msra.mxu0 0.0
      %1753 = vmatpush.msra.mxu0 0.0
      %1754 = vmatpush.msra.mxu0 0.0
      %1755 = vmatpush.msra.mxu0 0.0
      %1756 = vmatpush.msra.mxu0 0.0
      %1757 = vmatpush.msra.mxu0 0.0
      %1758 = vmatpush.msra.mxu0 %v1712
      %1759 = vmatmul.f32.gmra.mxu0 %v1721
      %v1760 = vpop.f32.mrf.mxu0
      %v1761 = vadd.f32 %v1718, %v1760
      %1762 = vdwg.mxu0
      %v1763 = vmax.f32 %v1741, 0.0
      %v1764 = vmax.f32 %v1761, 0.0
      %1765 = vst [vmem:[%s619] sm:$0xf] %v751
      %1766 = vst [vmem:[%s619 + $0x8] sm:$0xf] %v752
      %v1769 = vrot.slane %v1090, 4
      %v1770 = vrot.slane %v1091, 4
      %1773 = vst [vmem:[%s619] sm:$0xf0] %v1769
      %1774 = vst [vmem:[%s619 + $0x8] sm:$0xf0] %v1770
      %1775 = vst [vmem:[%s619 + $0x10] sm:$0xf] %v1769
      %1776 = vst [vmem:[%s619 + $0x18] sm:$0xf] %v1770
      %v1779 = vrot.slane %v1576, 4
      %v1780 = vrot.slane %v1577, 4
      %1783 = vst [vmem:[%s619 + $0x10] sm:$0xf0] %v1779
      %1784 = vst [vmem:[%s619 + $0x18] sm:$0xf0] %v1780
      %1785 = vst [vmem:[%s619 + $0x20] sm:$0xf] %v1779
      %1786 = vst [vmem:[%s619 + $0x28] sm:$0xf] %v1780
      %v1789 = vrot.slane %v1763, 4
      %v1790 = vrot.slane %v1764, 4
      %1793 = vst [vmem:[%s619 + $0x20] sm:$0xf0] %v1789
      %1794 = vst [vmem:[%s619 + $0x28] sm:$0xf0] %v1790
      %p1795 = scmp.lt.s32.totalorder %s30, 1
      %s1796 = scalar_select %p1795, %s30, 1
      %s1797 = smul.addr %s1796, 6
      %s1798 = smul.addr %s1797, 8
      %s1799 = scalar_lea.vmem %s19, %s1798
      // Predicated region
      $region97: #{up_forward.1} parent=95 // pred_check
        %p1800 = pneg %p457
      $region98: #{up_forward.1} parent=95 // pred_check_branch
        %1802 = sbr.rel (%p1800) target = $region100
      $region99: #{up_forward.1} parent=95 // pred_region
        _
      $region100: #{up_forward.1} parent=95 // pred_fallthru
        _
    $region96: #{up_forward.1} parent=5 // pred_fallthru
      _
    %p1803 = scmp.le.s32.totalorder 2, %s25
    // Predicated region
    $region101: #{up_forward.1} parent=5 // pred_check
      %p1804 = pneg %p1803
    $region102: #{up_forward.1} parent=5 // pred_check_branch
      %1806 = sbr.rel (%p1804) target = $region104
    $region103: #{up_forward.1} parent=5 // pred_region
      %s1807 = ssub.s32 %s25, 2
      // Predicated region
      $region105: #{up_forward.1} parent=103 // pred_check
        %p1808 = pneg %p463
      $region106: #{up_forward.1} parent=103 // pred_check_branch
        %1810 = sbr.rel (%p1808) target = $region108
      $region107: #{up_forward.1} parent=103 // pred_region
        %p1811 = scmp.lt.s32.totalorder %s31, 1
        %s1812 = scalar_select %p1811, %s31, 1
        %s1813 = smul.addr %s1812, 6
        %s1814 = smul.addr %s1813, 8
        %s1815 = scalar_lea.vmem %s19, %s1814
      $region108: #{up_forward.1} parent=103 // pred_fallthru
        _
    $region104: #{up_forward.1} parent=5 // pred_fallthru
      _
  $region6: #{up_forward.1} parent=0 // loop_footer
    %s29 = sadd.s32 1, %s25
  $region7: #{up_forward.1} parent=0 // loop_footer_branch
    %24 = sbr.rel target = $region3
  $region8: #{up_forward.1} parent=0 // loop_exit
    _

</llo_original>
